<compile_context>
chip_gen: v7x
topology: tpu7x:2x2x1
jax: 0.10.0
libtpu: 0.0.40
codegen_flags: <defaults>
</compile_context>

<pallas_src>
import functools

import jax
import jax.numpy as jnp
from jax.experimental import pallas as pl
from jax.experimental.pallas import tpu as pltpu


# ---------------------------------------------------------------------------
# Pass 1: fused BN batch statistics (per-channel sum and sum-of-squares).
# One HBM read of x; both moments accumulate in resident (Cin, 1) outputs.
# ---------------------------------------------------------------------------
def bn_stats_kernel(x_ref, s1_ref, s2_ref):
    # x_ref: (1, Cin, H*W) one batch element; s1/s2: (Cin, 1) f32 accumulators.
    @pl.when(pl.program_id(0) == 0)
    def _init():
        s1_ref[...] = jnp.zeros_like(s1_ref)
        s2_ref[...] = jnp.zeros_like(s2_ref)

    x = x_ref[0].astype(jnp.float32)                     # (Cin, HW)
    s1_ref[...] += jnp.sum(x, axis=1, keepdims=True)     # lane reduce (XLU)
    s2_ref[...] += jnp.sum(x * x, axis=1, keepdims=True)


# ---------------------------------------------------------------------------
# Pass 2: BN + ReLU + 1x1 conv + 2x2 average pool, reading NCHW directly.
# ---------------------------------------------------------------------------
def _make_transition_kernel(W, Wo, n_row_pairs, matmul_bf16):
    def kernel(x_ref, scale_ref, shift_ref, w_ref, b_ref, o_ref):
        # x_ref:     (1, Cin, TH*W)  TH even NCHW rows, spatial flat in lanes
        # scale_ref: (Cin, 1)        gamma * rsqrt(var + eps)
        # shift_ref: (Cin, 1)        beta - mean * scale
        # w_ref:     (Cout, Cin)     1x1 conv weight
        # b_ref:     (W, Wo)         W-pair avg-pool matrix (0.25 folded in)
        # o_ref:     (1, Cout, (TH // 2) * Wo)
        x = x_ref[0]                                              # (Cin, TH*W)
        y = jnp.maximum(x * scale_ref[...] + shift_ref[...], 0.0)  # BN + ReLU
        wmat = w_ref[...]
        if matmul_bf16:
            y = y.astype(jnp.bfloat16)
            wmat = wmat.astype(jnp.bfloat16)
        # 1x1 conv on the MXU, lane-dense: (Cout, Cin) @ (Cin, TH*W).
        z = jnp.dot(wmat, y, preferred_element_type=jnp.float32)  # (Cout, TH*W)
        poolb = b_ref[...]
        # 2x2 average pool.  Each row pair is 2*W contiguous lanes of z:
        #   H direction: add the two contiguous W-lane halves (VPU),
        #   W direction: tiny (Cout, W) @ (W, Wo) matmul with 0.25 folded in.
        # Garbage lanes of a ragged edge tile stay confined to their own row
        # pair and land in out-of-bounds output lanes (dropped on writeback).
        for hp in range(n_row_pairs):
            chunk = z[:, hp * 2 * W:(hp + 1) * 2 * W]             # (Cout, 2W)
            s = chunk[:, :W] + chunk[:, W:]                       # (Cout, W)
            o = jnp.dot(s, poolb, preferred_element_type=jnp.float32)
            o_ref[0, :, hp * Wo:(hp + 1) * Wo] = o.astype(o_ref.dtype)

    return kernel


def _pick_row_tile(H, W, Cin, itemsize, target_bytes):
    """Rows per block: even, with TH*W (input lanes) and TH*W/4 (output lanes)
    multiples of 128 — or TH == H (block spans the full spatial extent)."""
    if H * W * Cin * itemsize <= target_bytes:
        return H
    cands = [th for th in range(2, H, 2) if (th * W) % 512 == 0]
    if not cands:
        return H
    fit = [th for th in cands if th * W * Cin * itemsize <= target_bytes]
    if not fit:
        return min(cands)
    div = [th for th in fit if H % th == 0]        # prefer exact divisors of H
    return max(div) if div else max(fit)


def transition_block(x_nchw, gamma, beta, weight, eps=1e-5,
                     target_tile_bytes=4 << 20, matmul_bf16=False):
    """Forward of TransitionBlock: avg_pool2d(conv1x1(relu(bn(x))), 2).

    BN uses batch statistics (training-mode forward of nn.BatchNorm2d).
    x_nchw: (N, Cin, H, W); weight: (Cout, Cin, 1, 1). Returns NCHW output.
    target_tile_bytes: per-generation knob (~8 MiB v5e, 4-8 MiB v6e, 2-4 MiB v7x).
    """
    N, Cin, H, W = x_nchw.shape
    Cout = weight.shape[0]
    assert H % 2 == 0 and W % 2 == 0, "2x2 avg-pool path assumes even H, W"
    # TODO(synk): odd spatial dims (F.avg_pool2d floors) are not handled.
    Ho, Wo = H // 2, W // 2
    P = Ho * Wo
    HW = H * W
    itemsize = x_nchw.dtype.itemsize

    x_flat = x_nchw.reshape(N, Cin, HW)            # free view, no relayout pass

    # ---- Pass 1: fused BN batch stats (single extra HBM read of x) ---------
    s1, s2 = pl.pallas_call(
        bn_stats_kernel,
        out_shape=(jax.ShapeDtypeStruct((Cin, 1), jnp.float32),
                   jax.ShapeDtypeStruct((Cin, 1), jnp.float32)),
        grid_spec=pltpu.PrefetchScalarGridSpec(
            num_scalar_prefetch=0,
            grid=(N,),
            in_specs=[pl.BlockSpec((1, Cin, HW), lambda n: (n, 0, 0))],
            out_specs=[pl.BlockSpec((Cin, 1), lambda n: (0, 0)),
                       pl.BlockSpec((Cin, 1), lambda n: (0, 0))]),
        compiler_params=pltpu.CompilerParams(
            dimension_semantics=("arbitrary",),     # accumulates across batch
            vmem_limit_bytes=int(min(64 << 20,
                                     max(32 << 20, 4 * Cin * HW * itemsize))),
        ),
    )(x_flat)

    cnt = N * H * W
    mean = s1[:, 0] / cnt
    # Biased variance (PyTorch BN forward); clamp: f32 E[x^2]-E[x]^2 can dip < 0.
    var = jnp.maximum(s2[:, 0] / cnt - mean * mean, 0.0)
    inv = gamma.astype(jnp.float32) / jnp.sqrt(var + eps)
    scale = inv.reshape(Cin, 1)
    shift = (beta.astype(jnp.float32) - mean * inv).reshape(Cin, 1)

    w2d = weight.reshape(Cout, Cin).astype(jnp.float32)

    # W-pair average-pool matrix; the full 2x2 pool's 0.25 is folded in here
    # (the H-pair step in-kernel is a plain add).
    k = jnp.arange(Wo)
    pool_b = jnp.zeros((W, Wo), jnp.float32)
    pool_b = pool_b.at[2 * k, k].set(0.25)
    pool_b = pool_b.at[2 * k + 1, k].set(0.25)

    # ---- Pass 2: BN + ReLU + conv1x1 + avg-pool (one HBM read of x) --------
    TH = _pick_row_tile(H, W, Cin, itemsize, target_tile_bytes)
    THW = TH * W
    THoWo = THW // 4
    grid = (N, pl.cdiv(H, TH))                      # cdiv: ragged last tile OK

    # Explicit VMEM budget: double-buffered x/out blocks + (double-buffered)
    # constant blocks.  Capped at 64 MiB so it is valid on v7x's per-TC VMEM.
    x_blk = THW * Cin * itemsize
    o_blk = THoWo * Cout * itemsize
    const_blk = (Cout * Cin + 2 * Cin + W * Wo) * 4
    vmem_need = 2 * (x_blk + o_blk + const_blk)
    vmem_limit = int(min(64 << 20, max(32 << 20, 2 * vmem_need)))

    kernel = _make_transition_kernel(W, Wo, TH // 2, matmul_bf16)

    out = pl.pallas_call(
        kernel,
        out_shape=jax.ShapeDtypeStruct((N, Cout, P), x_nchw.dtype),
        grid_spec=pltpu.PrefetchScalarGridSpec(
            num_scalar_prefetch=0,
            grid=grid,
            in_specs=[
                pl.BlockSpec((1, Cin, THW), lambda n, t: (n, 0, t)),
                pl.BlockSpec((Cin, 1), lambda n, t: (0, 0)),
                pl.BlockSpec((Cin, 1), lambda n, t: (0, 0)),
                pl.BlockSpec((Cout, Cin), lambda n, t: (0, 0)),
                pl.BlockSpec((W, Wo), lambda n, t: (0, 0)),
            ],
            out_specs=pl.BlockSpec((1, Cout, THoWo), lambda n, t: (n, 0, t)),
        ),
        compiler_params=pltpu.CompilerParams(
            dimension_semantics=("parallel", "parallel"),  # megacore-friendly
            vmem_limit_bytes=vmem_limit,
        ),
    )(x_flat, scale, shift, w2d, pool_b)

    # (N, Cout, P) is NCHW with space flattened: free reshape, no transpose.
    return out.reshape(N, Cout, Ho, Wo)


def reference(x_nchw, gamma, beta, weight, eps=1e-5):
    """Pure-JAX reference with the exact PyTorch op order (for validation)."""
    mean = jnp.mean(x_nchw, axis=(0, 2, 3), keepdims=True)
    var = jnp.var(x_nchw, axis=(0, 2, 3), keepdims=True)
    y = (x_nchw - mean) / jnp.sqrt(var + eps)
    y = y * gamma.reshape(1, -1, 1, 1) + beta.reshape(1, -1, 1, 1)
    y = jnp.maximum(y, 0.0)
    z = jnp.einsum('nchw,oc->nohw', y, weight.reshape(weight.shape[0], -1))
    N, Co, H, W = z.shape
    z = z.reshape(N, Co, H // 2, 2, W // 2, 2).mean(axis=(3, 5))
    return z


def _check(out, ref, shape):
    assert out.shape == shape, (out.shape, shape)
    err = float(jnp.max(jnp.abs(out - ref)))
    assert jnp.allclose(out, ref, atol=1e-4, rtol=1e-4), err


if __name__ == "__main__":
    key = jax.random.PRNGKey(0)
    k_x, k_g, k_b, k_w, k_x2, k_x3 = jax.random.split(key, 6)

    # --- Main test: small TransitionBlock-like shapes ------------------------
    N, Cin, H, W = 2, 8, 16, 16
    Cout = 4
    x = jax.random.normal(k_x, (N, Cin, H, W), dtype=jnp.float32)
    gamma = jax.random.uniform(k_g, (Cin,), dtype=jnp.float32,
                               minval=0.5, maxval=1.5)
    beta = 0.1 * jax.random.normal(k_b, (Cin,), dtype=jnp.float32)
    weight = jax.random.normal(k_w, (Cout, Cin, 1, 1),
                               dtype=jnp.float32) / jnp.sqrt(Cin)

    out = jax.block_until_ready(jax.jit(transition_block)(x, gamma, beta, weight))
    _check(out, reference(x, gamma, beta, weight), (N, Cout, H // 2, W // 2))

    # --- Tiled path: small target tile forces row tiling (grid (N, 2)) -------
    H2, W2 = 16, 128
    x2 = jax.random.normal(k_x2, (N, Cin, H2, W2), dtype=jnp.float32)
    f2 = jax.jit(functools.partial(transition_block, target_tile_bytes=32 * 1024))
    out2 = jax.block_until_ready(f2(x2, gamma, beta, weight))
    _check(out2, reference(x2, gamma, beta, weight), (N, Cout, H2 // 2, W2 // 2))

    # --- Ragged path: H not a multiple of the row tile (cdiv grid) -----------
    H3, W3 = 6, 128
    x3 = jax.random.normal(k_x3, (1, Cin, H3, W3), dtype=jnp.float32)
    f3 = jax.jit(functools.partial(transition_block, target_tile_bytes=16 * 1024))
    out3 = jax.block_until_ready(f3(x3, gamma, beta, weight))
    _check(out3, reference(x3, gamma, beta, weight), (1, Cout, H3 // 2, W3 // 2))

    print("KERNEL_OK")
</pallas_src>

<mosaic_0001>
module attributes {stable_mosaic.version = 11 : i64} {
  func.func @bn_stats_kernel(%arg0: i32, %arg1: memref<1x8x256xf32, #tpu.memory_space<vmem>>, %arg2: memref<8x1xf32, #tpu.memory_space<vmem>>, %arg3: memref<8x1xf32, #tpu.memory_space<vmem>>) attributes {dimension_semantics = [#tpu.dimension_semantics<arbitrary>], iteration_bounds = array<i64: 2>, scalar_prefetch = 0 : i64, scratch_operands = 0 : i64, tpu.core_type = #tpu.core_type<tc>, window_params = [{transform_indices = @transform_0, window_bounds = array<i64: 1, 8, 256>}, {pipeline_mode = #tpu.pipeline_mode<synchronous>, transform_indices = @transform_1, window_bounds = array<i64: 8, 1>}, {pipeline_mode = #tpu.pipeline_mode<synchronous>, transform_indices = @transform_2, window_bounds = array<i64: 8, 1>}]} {
    %c0_i32 = arith.constant 0 : i32
    %0 = arith.cmpi eq, %arg0, %c0_i32 : i32
    %1 = arith.extui %0 : i1 to i32
    %c0_i32_0 = arith.constant 0 : i32
    %2 = arith.cmpi ne, %1, %c0_i32_0 : i32
    scf.if %2 {
      %cst_12 = arith.constant 0.000000e+00 : f32
      %16 = vector.broadcast %cst_12 : f32 to vector<8x1xf32>
      %c0_13 = arith.constant 0 : index
      %c0_14 = arith.constant 0 : index
      %17 = vector.load %arg2[%c0_13, %c0_14] : memref<8x1xf32, #tpu.memory_space<vmem>>, vector<8x1xf32>
      tpu.vector_store %arg2[%c0_13, %c0_14], %16 {strides = array<i32>} : memref<8x1xf32, #tpu.memory_space<vmem>>, vector<8x1xf32>,
      %cst_15 = arith.constant 0.000000e+00 : f32
      %18 = vector.broadcast %cst_15 : f32 to vector<8x1xf32>
      %c0_16 = arith.constant 0 : index
      %c0_17 = arith.constant 0 : index
      %19 = vector.load %arg3[%c0_16, %c0_17] : memref<8x1xf32, #tpu.memory_space<vmem>>, vector<8x1xf32>
      tpu.vector_store %arg3[%c0_16, %c0_17], %18 {strides = array<i32>} : memref<8x1xf32, #tpu.memory_space<vmem>>, vector<8x1xf32>,
    } else {
    }
    %c0 = arith.constant 0 : index
    %c0_1 = arith.constant 0 : index
    %c0_2 = arith.constant 0 : index
    %3 = vector.load %arg1[%c0, %c0_1, %c0_2] : memref<1x8x256xf32, #tpu.memory_space<vmem>>, vector<1x8x256xf32>
    %4 = vector.shape_cast %3 : vector<1x8x256xf32> to vector<8x256xf32>
    %c0_3 = arith.constant 0 : index
    %c0_4 = arith.constant 0 : index
    %5 = vector.load %arg2[%c0_3, %c0_4] : memref<8x1xf32, #tpu.memory_space<vmem>>, vector<8x1xf32>
    %cst = arith.constant dense<0.000000e+00> : vector<8xf32>
    %6 = vector.multi_reduction <add>, %4, %cst [1] : vector<8x256xf32> to vector<8xf32>
    %7 = vector.shape_cast %6 : vector<8xf32> to vector<8x1xf32>
    %8 = arith.addf %5, %7 : vector<8x1xf32>
    %c0_5 = arith.constant 0 : index
    %c0_6 = arith.constant 0 : index
    %9 = vector.load %arg2[%c0_5, %c0_6] : memref<8x1xf32, #tpu.memory_space<vmem>>, vector<8x1xf32>
    tpu.vector_store %arg2[%c0_5, %c0_6], %8 {strides = array<i32>} : memref<8x1xf32, #tpu.memory_space<vmem>>, vector<8x1xf32>,
    %c0_7 = arith.constant 0 : index
    %c0_8 = arith.constant 0 : index
    %10 = vector.load %arg3[%c0_7, %c0_8] : memref<8x1xf32, #tpu.memory_space<vmem>>, vector<8x1xf32>
    %11 = arith.mulf %4, %4 : vector<8x256xf32>
    %cst_9 = arith.constant dense<0.000000e+00> : vector<8xf32>
    %12 = vector.multi_reduction <add>, %11, %cst_9 [1] : vector<8x256xf32> to vector<8xf32>
    %13 = vector.shape_cast %12 : vector<8xf32> to vector<8x1xf32>
    %14 = arith.addf %10, %13 : vector<8x1xf32>
    %c0_10 = arith.constant 0 : index
    %c0_11 = arith.constant 0 : index
    %15 = vector.load %arg3[%c0_10, %c0_11] : memref<8x1xf32, #tpu.memory_space<vmem>>, vector<8x1xf32>
    tpu.vector_store %arg3[%c0_10, %c0_11], %14 {strides = array<i32>} : memref<8x1xf32, #tpu.memory_space<vmem>>, vector<8x1xf32>,
    return
  }
  func.func @transform_0(%arg0: i32) -> (i32, i32, i32) {
    %c0_i32 = arith.constant 0 : i32
    %c0_i32_0 = arith.constant 0 : i32
    %c0_i32_1 = arith.constant 0 : i32
    return %arg0, %c0_i32, %c0_i32_0 : i32, i32, i32
  }
  func.func @transform_1(%arg0: i32) -> (i32, i32) {
    %c0_i32 = arith.constant 0 : i32
    %c0_i32_0 = arith.constant 0 : i32
    %c0_i32_1 = arith.constant 0 : i32
    return %c0_i32, %c0_i32_0 : i32, i32
  }
  func.func @transform_2(%arg0: i32) -> (i32, i32) {
    %c0_i32 = arith.constant 0 : i32
    %c0_i32_0 = arith.constant 0 : i32
    %c0_i32_1 = arith.constant 0 : i32
    return %c0_i32, %c0_i32_0 : i32, i32
  }
}

module attributes {stable_mosaic.version = 11 : i64} {
  func.func @kernel(%arg0: i32, %arg1: i32, %arg2: memref<1x8x256xf32, #tpu.memory_space<vmem>>, %arg3: memref<8x1xf32, #tpu.memory_space<vmem>>, %arg4: memref<8x1xf32, #tpu.memory_space<vmem>>, %arg5: memref<4x8xf32, #tpu.memory_space<vmem>>, %arg6: memref<16x8xf32, #tpu.memory_space<vmem>>, %arg7: memref<1x4x64xf32, #tpu.memory_space<vmem>>) attributes {dimension_semantics = [#tpu.dimension_semantics<parallel>, #tpu.dimension_semantics<parallel>], iteration_bounds = array<i64: 2, 1>, scalar_prefetch = 0 : i64, scratch_operands = 0 : i64, tpu.core_type = #tpu.core_type<tc>, window_params = [{transform_indices = @transform_0, window_bounds = array<i64: 1, 8, 256>}, {pipeline_mode = #tpu.pipeline_mode<synchronous>, transform_indices = @transform_1, window_bounds = array<i64: 8, 1>}, {pipeline_mode = #tpu.pipeline_mode<synchronous>, transform_indices = @transform_2, window_bounds = array<i64: 8, 1>}, {pipeline_mode = #tpu.pipeline_mode<synchronous>, transform_indices = @transform_3, window_bounds = array<i64: 4, 8>}, {pipeline_mode = #tpu.pipeline_mode<synchronous>, transform_indices = @transform_4, window_bounds = array<i64: 16, 8>}, {transform_indices = @transform_5, window_bounds = array<i64: 1, 4, 64>}]} {
    %c0 = arith.constant 0 : index
    %c0_0 = arith.constant 0 : index
    %c0_1 = arith.constant 0 : index
    %0 = vector.load %arg2[%c0, %c0_0, %c0_1] : memref<1x8x256xf32, #tpu.memory_space<vmem>>, vector<1x8x256xf32>
    %1 = vector.shape_cast %0 : vector<1x8x256xf32> to vector<8x256xf32>
    %c0_2 = arith.constant 0 : index
    %c0_3 = arith.constant 0 : index
    %2 = vector.load %arg3[%c0_2, %c0_3] : memref<8x1xf32, #tpu.memory_space<vmem>>, vector<8x1xf32>
    %3 = vector.broadcast %2 : vector<8x1xf32> to vector<8x256xf32>
    %4 = arith.mulf %1, %3 : vector<8x256xf32>
    %c0_4 = arith.constant 0 : index
    %c0_5 = arith.constant 0 : index
    %5 = vector.load %arg4[%c0_4, %c0_5] : memref<8x1xf32, #tpu.memory_space<vmem>>, vector<8x1xf32>
    %6 = vector.broadcast %5 : vector<8x1xf32> to vector<8x256xf32>
    %7 = arith.addf %4, %6 : vector<8x256xf32>
    %cst = arith.constant 0.000000e+00 : f32
    %8 = vector.broadcast %cst : f32 to vector<8x256xf32>
    %9 = arith.maximumf %7, %8 : vector<8x256xf32>
    %c0_6 = arith.constant 0 : index
    %c0_7 = arith.constant 0 : index
    %10 = vector.load %arg5[%c0_6, %c0_7] : memref<4x8xf32, #tpu.memory_space<vmem>>, vector<4x8xf32>
    %cst_8 = arith.constant dense<0.000000e+00> : vector<4x256xf32>
    %11 = tpu.matmul %10, %9, %cst_8 {dimension_numbers = #tpu.dot_dimension_numbers<[1], [0], [0], [1], [0, 0, 1, 1], [], []>} : vector<4x8xf32>, vector<8x256xf32>, vector<4x256xf32> -> vector<4x256xf32>
    %c0_9 = arith.constant 0 : index
    %c0_10 = arith.constant 0 : index
    %12 = vector.load %arg6[%c0_9, %c0_10] : memref<16x8xf32, #tpu.memory_space<vmem>>, vector<16x8xf32>
    %13 = vector.extract_strided_slice %11 {offsets = [0, 0], sizes = [4, 32], strides = [1, 1]} : vector<4x256xf32> to vector<4x32xf32>
    %14 = vector.extract_strided_slice %13 {offsets = [0, 0], sizes = [4, 16], strides = [1, 1]} : vector<4x32xf32> to vector<4x16xf32>
    %15 = vector.extract_strided_slice %13 {offsets = [0, 16], sizes = [4, 16], strides = [1, 1]} : vector<4x32xf32> to vector<4x16xf32>
    %16 = arith.addf %14, %15 : vector<4x16xf32>
    %cst_11 = arith.constant dense<0.000000e+00> : vector<4x8xf32>
    %17 = tpu.matmul %16, %12, %cst_11 {dimension_numbers = #tpu.dot_dimension_numbers<[1], [0], [0], [1], [0, 0, 1, 1], [], []>} : vector<4x16xf32>, vector<16x8xf32>, vector<4x8xf32> -> vector<4x8xf32>
    %c0_12 = arith.constant 0 : index
    %c0_13 = arith.constant 0 : index
    %c0_14 = arith.constant 0 : index
    %18 = vector.load %arg7[%c0_12, %c0_13, %c0_14] : memref<1x4x64xf32, #tpu.memory_space<vmem>>, vector<1x4x8xf32>
    %19 = vector.shape_cast %18 : vector<1x4x8xf32> to vector<4x8xf32>
    %20 = vector.shape_cast %17 : vector<4x8xf32> to vector<1x4x8xf32>
    tpu.vector_store %arg7[%c0_12, %c0_13, %c0_14], %20 {strides = array<i32>} : memref<1x4x64xf32, #tpu.memory_space<vmem>>, vector<1x4x8xf32>,
    %21 = vector.extract_strided_slice %11 {offsets = [0, 32], sizes = [4, 32], strides = [1, 1]} : vector<4x256xf32> to vector<4x32xf32>
    %22 = vector.extract_strided_slice %21 {offsets = [0, 0], sizes = [4, 16], strides = [1, 1]} : vector<4x32xf32> to vector<4x16xf32>
    %23 = vector.extract_strided_slice %21 {offsets = [0, 16], sizes = [4, 16], strides = [1, 1]} : vector<4x32xf32> to vector<4x16xf32>
    %24 = arith.addf %22, %23 : vector<4x16xf32>
    %cst_15 = arith.constant dense<0.000000e+00> : vector<4x8xf32>
    %25 = tpu.matmul %24, %12, %cst_15 {dimension_numbers = #tpu.dot_dimension_numbers<[1], [0], [0], [1], [0, 0, 1, 1], [], []>} : vector<4x16xf32>, vector<16x8xf32>, vector<4x8xf32> -> vector<4x8xf32>
    %c0_16 = arith.constant 0 : index
    %c0_17 = arith.constant 0 : index
    %c8 = arith.constant 8 : index
    %26 = vector.load %arg7[%c0_16, %c0_17, %c8] : memref<1x4x64xf32, #tpu.memory_space<vmem>>, vector<1x4x8xf32>
    %27 = vector.shape_cast %26 : vector<1x4x8xf32> to vector<4x8xf32>
    %28 = vector.shape_cast %25 : vector<4x8xf32> to vector<1x4x8xf32>
    tpu.vector_store %arg7[%c0_16, %c0_17, %c8], %28 {strides = array<i32>} : memref<1x4x64xf32, #tpu.memory_space<vmem>>, vector<1x4x8xf32>,
    %29 = vector.extract_strided_slice %11 {offsets = [0, 64], sizes = [4, 32], strides = [1, 1]} : vector<4x256xf32> to vector<4x32xf32>
    %30 = vector.extract_strided_slice %29 {offsets = [0, 0], sizes = [4, 16], strides = [1, 1]} : vector<4x32xf32> to vector<4x16xf32>
    %31 = vector.extract_strided_slice %29 {offsets = [0, 16], sizes = [4, 16], strides = [1, 1]} : vector<4x32xf32> to vector<4x16xf32>
    %32 = arith.addf %30, %31 : vector<4x16xf32>
    %cst_18 = arith.constant dense<0.000000e+00> : vector<4x8xf32>
    %33 = tpu.matmul %32, %12, %cst_18 {dimension_numbers = #tpu.dot_dimension_numbers<[1], [0], [0], [1], [0, 0, 1, 1], [], []>} : vector<4x16xf32>, vector<16x8xf32>, vector<4x8xf32> -> vector<4x8xf32>
    %c0_19 = arith.constant 0 : index
    %c0_20 = arith.constant 0 : index
    %c16 = arith.constant 16 : index
    %34 = vector.load %arg7[%c0_19, %c0_20, %c16] : memref<1x4x64xf32, #tpu.memory_space<vmem>>, vector<1x4x8xf32>
    %35 = vector.shape_cast %34 : vector<1x4x8xf32> to vector<4x8xf32>
    %36 = vector.shape_cast %33 : vector<4x8xf32> to vector<1x4x8xf32>
    tpu.vector_store %arg7[%c0_19, %c0_20, %c16], %36 {strides = array<i32>} : memref<1x4x64xf32, #tpu.memory_space<vmem>>, vector<1x4x8xf32>,
    %37 = vector.extract_strided_slice %11 {offsets = [0, 96], sizes = [4, 32], strides = [1, 1]} : vector<4x256xf32> to vector<4x32xf32>
    %38 = vector.extract_strided_slice %37 {offsets = [0, 0], sizes = [4, 16], strides = [1, 1]} : vector<4x32xf32> to vector<4x16xf32>
    %39 = vector.extract_strided_slice %37 {offsets = [0, 16], sizes = [4, 16], strides = [1, 1]} : vector<4x32xf32> to vector<4x16xf32>
    %40 = arith.addf %38, %39 : vector<4x16xf32>
    %cst_21 = arith.constant dense<0.000000e+00> : vector<4x8xf32>
    %41 = tpu.matmul %40, %12, %cst_21 {dimension_numbers = #tpu.dot_dimension_numbers<[1], [0], [0], [1], [0, 0, 1, 1], [], []>} : vector<4x16xf32>, vector<16x8xf32>, vector<4x8xf32> -> vector<4x8xf32>
    %c0_22 = arith.constant 0 : index
    %c0_23 = arith.constant 0 : index
    %c24 = arith.constant 24 : index
    %42 = vector.load %arg7[%c0_22, %c0_23, %c24] : memref<1x4x64xf32, #tpu.memory_space<vmem>>, vector<1x4x8xf32>
    %43 = vector.shape_cast %42 : vector<1x4x8xf32> to vector<4x8xf32>
    %44 = vector.shape_cast %41 : vector<4x8xf32> to vector<1x4x8xf32>
    tpu.vector_store %arg7[%c0_22, %c0_23, %c24], %44 {strides = array<i32>} : memref<1x4x64xf32, #tpu.memory_space<vmem>>, vector<1x4x8xf32>,
    %45 = vector.extract_strided_slice %11 {offsets = [0, 128], sizes = [4, 32], strides = [1, 1]} : vector<4x256xf32> to vector<4x32xf32>
    %46 = vector.extract_strided_slice %45 {offsets = [0, 0], sizes = [4, 16], strides = [1, 1]} : vector<4x32xf32> to vector<4x16xf32>
    %47 = vector.extract_strided_slice %45 {offsets = [0, 16], sizes = [4, 16], strides = [1, 1]} : vector<4x32xf32> to vector<4x16xf32>
    %48 = arith.addf %46, %47 : vector<4x16xf32>
    %cst_24 = arith.constant dense<0.000000e+00> : vector<4x8xf32>
    %49 = tpu.matmul %48, %12, %cst_24 {dimension_numbers = #tpu.dot_dimension_numbers<[1], [0], [0], [1], [0, 0, 1, 1], [], []>} : vector<4x16xf32>, vector<16x8xf32>, vector<4x8xf32> -> vector<4x8xf32>
    %c0_25 = arith.constant 0 : index
    %c0_26 = arith.constant 0 : index
    %c32 = arith.constant 32 : index
    %50 = vector.load %arg7[%c0_25, %c0_26, %c32] : memref<1x4x64xf32, #tpu.memory_space<vmem>>, vector<1x4x8xf32>
    %51 = vector.shape_cast %50 : vector<1x4x8xf32> to vector<4x8xf32>
    %52 = vector.shape_cast %49 : vector<4x8xf32> to vector<1x4x8xf32>
    tpu.vector_store %arg7[%c0_25, %c0_26, %c32], %52 {strides = array<i32>} : memref<1x4x64xf32, #tpu.memory_space<vmem>>, vector<1x4x8xf32>,
    %53 = vector.extract_strided_slice %11 {offsets = [0, 160], sizes = [4, 32], strides = [1, 1]} : vector<4x256xf32> to vector<4x32xf32>
    %54 = vector.extract_strided_slice %53 {offsets = [0, 0], sizes = [4, 16], strides = [1, 1]} : vector<4x32xf32> to vector<4x16xf32>
    %55 = vector.extract_strided_slice %53 {offsets = [0, 16], sizes = [4, 16], strides = [1, 1]} : vector<4x32xf32> to vector<4x16xf32>
    %56 = arith.addf %54, %55 : vector<4x16xf32>
    %cst_27 = arith.constant dense<0.000000e+00> : vector<4x8xf32>
    %57 = tpu.matmul %56, %12, %cst_27 {dimension_numbers = #tpu.dot_dimension_numbers<[1], [0], [0], [1], [0, 0, 1, 1], [], []>} : vector<4x16xf32>, vector<16x8xf32>, vector<4x8xf32> -> vector<4x8xf32>
    %c0_28 = arith.constant 0 : index
    %c0_29 = arith.constant 0 : index
    %c40 = arith.constant 40 : index
    %58 = vector.load %arg7[%c0_28, %c0_29, %c40] : memref<1x4x64xf32, #tpu.memory_space<vmem>>, vector<1x4x8xf32>
    %59 = vector.shape_cast %58 : vector<1x4x8xf32> to vector<4x8xf32>
    %60 = vector.shape_cast %57 : vector<4x8xf32> to vector<1x4x8xf32>
    tpu.vector_store %arg7[%c0_28, %c0_29, %c40], %60 {strides = array<i32>} : memref<1x4x64xf32, #tpu.memory_space<vmem>>, vector<1x4x8xf32>,
    %61 = vector.extract_strided_slice %11 {offsets = [0, 192], sizes = [4, 32], strides = [1, 1]} : vector<4x256xf32> to vector<4x32xf32>
    %62 = vector.extract_strided_slice %61 {offsets = [0, 0], sizes = [4, 16], strides = [1, 1]} : vector<4x32xf32> to vector<4x16xf32>
    %63 = vector.extract_strided_slice %61 {offsets = [0, 16], sizes = [4, 16], strides = [1, 1]} : vector<4x32xf32> to vector<4x16xf32>
    %64 = arith.addf %62, %63 : vector<4x16xf32>
    %cst_30 = arith.constant dense<0.000000e+00> : vector<4x8xf32>
    %65 = tpu.matmul %64, %12, %cst_30 {dimension_numbers = #tpu.dot_dimension_numbers<[1], [0], [0], [1], [0, 0, 1, 1], [], []>} : vector<4x16xf32>, vector<16x8xf32>, vector<4x8xf32> -> vector<4x8xf32>
    %c0_31 = arith.constant 0 : index
    %c0_32 = arith.constant 0 : index
    %c48 = arith.constant 48 : index
    %66 = vector.load %arg7[%c0_31, %c0_32, %c48] : memref<1x4x64xf32, #tpu.memory_space<vmem>>, vector<1x4x8xf32>
    %67 = vector.shape_cast %66 : vector<1x4x8xf32> to vector<4x8xf32>
    %68 = vector.shape_cast %65 : vector<4x8xf32> to vector<1x4x8xf32>
    tpu.vector_store %arg7[%c0_31, %c0_32, %c48], %68 {strides = array<i32>} : memref<1x4x64xf32, #tpu.memory_space<vmem>>, vector<1x4x8xf32>,
    %69 = vector.extract_strided_slice %11 {offsets = [0, 224], sizes = [4, 32], strides = [1, 1]} : vector<4x256xf32> to vector<4x32xf32>
    %70 = vector.extract_strided_slice %69 {offsets = [0, 0], sizes = [4, 16], strides = [1, 1]} : vector<4x32xf32> to vector<4x16xf32>
    %71 = vector.extract_strided_slice %69 {offsets = [0, 16], sizes = [4, 16], strides = [1, 1]} : vector<4x32xf32> to vector<4x16xf32>
    %72 = arith.addf %70, %71 : vector<4x16xf32>
    %cst_33 = arith.constant dense<0.000000e+00> : vector<4x8xf32>
    %73 = tpu.matmul %72, %12, %cst_33 {dimension_numbers = #tpu.dot_dimension_numbers<[1], [0], [0], [1], [0, 0, 1, 1], [], []>} : vector<4x16xf32>, vector<16x8xf32>, vector<4x8xf32> -> vector<4x8xf32>
    %c0_34 = arith.constant 0 : index
    %c0_35 = arith.constant 0 : index
    %c56 = arith.constant 56 : index
    %74 = vector.load %arg7[%c0_34, %c0_35, %c56] : memref<1x4x64xf32, #tpu.memory_space<vmem>>, vector<1x4x8xf32>
    %75 = vector.shape_cast %74 : vector<1x4x8xf32> to vector<4x8xf32>
    %76 = vector.shape_cast %73 : vector<4x8xf32> to vector<1x4x8xf32>
    tpu.vector_store %arg7[%c0_34, %c0_35, %c56], %76 {strides = array<i32>} : memref<1x4x64xf32, #tpu.memory_space<vmem>>, vector<1x4x8xf32>,
    return
  }
  func.func @transform_0(%arg0: i32, %arg1: i32) -> (i32, i32, i32) {
    %c0_i32 = arith.constant 0 : i32
    %c0_i32_0 = arith.constant 0 : i32
    return %arg0, %c0_i32, %arg1 : i32, i32, i32
  }
  func.func @transform_1(%arg0: i32, %arg1: i32) -> (i32, i32) {
    %c0_i32 = arith.constant 0 : i32
    %c0_i32_0 = arith.constant 0 : i32
    %c0_i32_1 = arith.constant 0 : i32
    return %c0_i32, %c0_i32_0 : i32, i32
  }
  func.func @transform_2(%arg0: i32, %arg1: i32) -> (i32, i32) {
    %c0_i32 = arith.constant 0 : i32
    %c0_i32_0 = arith.constant 0 : i32
    %c0_i32_1 = arith.constant 0 : i32
    return %c0_i32, %c0_i32_0 : i32, i32
  }
  func.func @transform_3(%arg0: i32, %arg1: i32) -> (i32, i32) {
    %c0_i32 = arith.constant 0 : i32
    %c0_i32_0 = arith.constant 0 : i32
    %c0_i32_1 = arith.constant 0 : i32
    return %c0_i32, %c0_i32_0 : i32, i32
  }
  func.func @transform_4(%arg0: i32, %arg1: i32) -> (i32, i32) {
    %c0_i32 = arith.constant 0 : i32
    %c0_i32_0 = arith.constant 0 : i32
    %c0_i32_1 = arith.constant 0 : i32
    return %c0_i32, %c0_i32_0 : i32, i32
  }
  func.func @transform_5(%arg0: i32, %arg1: i32) -> (i32, i32, i32) {
    %c0_i32 = arith.constant 0 : i32
    %c0_i32_0 = arith.constant 0 : i32
    return %arg0, %c0_i32, %arg1 : i32, i32, i32
  }
}

</mosaic_0001>

<llo_original>
// kernel: transition_block.2
$region0: #{transition_block.2}
  #allocation0 [shape = 'u32[]', space=smem, size = 0x4, offset = 0x4, fixed_abs, tag = 'smem constant byte address 0x4 - core index']
  #allocation1 [shape = 'u32[144,128]{1,0:T(1,128)}', space=vmem, size = 0x12000, scoped, tag = 'internal scratch']
  %s0 = inlined_call_operand.vmem [shape: f32[2,8,256], index: 0, kind: input, shape index: {}]
  %s1 = inlined_call_operand.vmem [shape: f32[8,1], index: 1, kind: output, shape index: {0}]
  %s2 = inlined_call_operand.vmem [shape: f32[8,1], index: 2, kind: output, shape index: {1}]
  %3 = xla_tuple %s1, %s2
  %s4 = sld [smem:[#allocation0]]
  $region49: #{transition_block.2} parent=0
    _
  %s6 = ssub.s32 1, %s4
  %s7 = scalar_select 0, %s6, %s4
  loop: start=0, step=1, limit=4
  $region2: #{transition_block.2} parent=0 // loop_pre_header
    _
  $region3: #{transition_block.2} parent=0 // loop_header
    %s9 = sphi 0, %s13
    %p10 = scmp.ge.s32.totalorder %s9, 4
    %s19 = sphi 0, %s21
    %s22 = sphi 0, %s19
    %s23 = sphi 0, %s22
    %s39 = sphi 0, %s23
    %s43 = sphi 0, %s43
    %s45 = sphi 0, %s43
    %s46 = sphi 0, %s45
    %s60 = sphi 0, %s46
    %s64 = sphi 0, %s64
    %s66 = sphi 0, %s64
    %s67 = sphi 0, %s66
    %s81 = sphi 0, %s67
  $region4: #{transition_block.2} parent=0 // loop_header_branch
    %12 = sbr.rel (%p10) target = $region8
  $region5: #{transition_block.2} parent=0 // loop_body
    %s14 = ssub.s32 %s9, 1
    %s15 = ssub.s32 %s9, 2
    %s16 = sadd.s32 %s9, 1
    %s17 = ssub.s32 %s9, %s16
    %p18 = scmp.eq.s32.totalorder %s17, 0
    %s20 = sadd.s32 %s19, 1
    %s21 = scalar_select %p18, %s19, %s20
    %p24 = pneg %p18
    %p25 = scmp.eq.s32.totalorder %s9, 1
    %p26 = por %p24, %p25
    %p27 = scmp.ne.s32.totalorder %s19, %s22
    %p28 = scmp.eq.s32.totalorder %s9, 0
    %p29 = por %p27, %p28
    %p30 = scmp.ne.s32.totalorder %s19, %s22
    %p31 = scmp.eq.s32.totalorder %s14, 1
    %p32 = por %p30, %p31
    %p33 = scmp.ne.s32.totalorder %s22, %s23
    %p34 = scmp.eq.s32.totalorder %s14, 0
    %p35 = por %p33, %p34
    %p36 = scmp.ne.s32.totalorder %s22, %s23
    %p37 = scmp.eq.s32.totalorder %s15, 1
    %p38 = por %p36, %p37
    %p40 = scmp.ne.s32.totalorder %s23, %s39
    %p41 = scmp.eq.s32.totalorder %s15, 0
    %p42 = por %p40, %p41
    %s44 = sadd.s32 %s43, 1
    %p47 = scmp.eq.s32.totalorder %s9, 1
    %p48 = scmp.ne.s32.totalorder %s43, %s45
    %p49 = scmp.eq.s32.totalorder %s9, 0
    %p50 = por %p48, %p49
    %p51 = scmp.ne.s32.totalorder %s43, %s45
    %p52 = scmp.eq.s32.totalorder %s14, 1
    %p53 = por %p51, %p52
    %p54 = scmp.ne.s32.totalorder %s45, %s46
    %p55 = scmp.eq.s32.totalorder %s14, 0
    %p56 = por %p54, %p55
    %p57 = scmp.ne.s32.totalorder %s45, %s46
    %p58 = scmp.eq.s32.totalorder %s15, 1
    %p59 = por %p57, %p58
    %p61 = scmp.ne.s32.totalorder %s46, %s60
    %p62 = scmp.eq.s32.totalorder %s15, 0
    %p63 = por %p61, %p62
    %s65 = sadd.s32 %s64, 1
    %p68 = scmp.eq.s32.totalorder %s9, 1
    %p69 = scmp.ne.s32.totalorder %s64, %s66
    %p70 = scmp.eq.s32.totalorder %s9, 0
    %p71 = por %p69, %p70
    %p72 = scmp.ne.s32.totalorder %s64, %s66
    %p73 = scmp.eq.s32.totalorder %s14, 1
    %p74 = por %p72, %p73
    %p75 = scmp.ne.s32.totalorder %s66, %s67
    %p76 = scmp.eq.s32.totalorder %s14, 0
    %p77 = por %p75, %p76
    %p78 = scmp.ne.s32.totalorder %s66, %s67
    %p79 = scmp.eq.s32.totalorder %s15, 1
    %p80 = por %p78, %p79
    %p82 = scmp.ne.s32.totalorder %s67, %s81
    %p83 = scmp.eq.s32.totalorder %s15, 0
    %p84 = por %p82, %p83
    %p85 = scmp.le.s32.totalorder 1, %s9
    %p86 = scmp.lt.s32.totalorder %s9, 3
    %p87 = pnand %p85, %p86
    %p88 = pneg %p87
    // Predicated region
    $region9: #{transition_block.2} parent=5 // pred_check
      _
    $region10: #{transition_block.2} parent=5 // pred_check_branch
      %90 = sbr.rel (%p87) target = $region12
    $region11: #{transition_block.2} parent=5 // pred_region
      %s91 = ssub.s32 %s9, 1
    $region12: #{transition_block.2} parent=5 // pred_fallthru
      _
    %p92 = scmp.lt.s32.totalorder %s9, 2
    // Predicated region
    $region13: #{transition_block.2} parent=5 // pred_check
      %p93 = pneg %p92
    $region14: #{transition_block.2} parent=5 // pred_check_branch
      %95 = sbr.rel (%p93) target = $region16
    $region15: #{transition_block.2} parent=5 // pred_region
      // Predicated region
      $region17: #{transition_block.2} parent=15 // pred_check
        %p96 = pneg %p29
      $region18: #{transition_block.2} parent=15 // pred_check_branch
        %98 = sbr.rel (%p96) target = $region20
      $region19: #{transition_block.2} parent=15 // pred_region
        %p99 = scmp.lt.s32.totalorder %s9, 1
        %s100 = scalar_select %p99, %s9, 1
        %s101 = smul.addr %s100, 2
        %s102 = smul.addr %s101, 8
        %s103 = scalar_lea.vmem %s0, %s102
      $region20: #{transition_block.2} parent=15 // pred_fallthru
        _
    $region16: #{transition_block.2} parent=5 // pred_fallthru
      _
    %p104 = scmp.le.s32.totalorder 1, %s9
    %p105 = scmp.lt.s32.totalorder %s9, 3
    %p106 = pnand %p104, %p105
    %p107 = pneg %p106
    // Predicated region
    $region21: #{transition_block.2} parent=5 // pred_check
      _
    $region22: #{transition_block.2} parent=5 // pred_check_branch
      %109 = sbr.rel (%p106) target = $region24
    $region23: #{transition_block.2} parent=5 // pred_region
      %s110 = ssub.s32 %s9, 1
      %p111 = scmp.lt.s32.totalorder %s14, 1
      %s112 = scalar_select %p111, %s14, 1
      %s113 = smul.addr %s112, 2
      %s114 = smul.addr %s113, 8
      %s115 = scalar_lea.vmem %s0, %s114
      %p116 = pneg %p35
      %p117 = pneg %p32
      %p118 = pneg %p56
      %p119 = pneg %p53
      %p120 = pneg %p77
      %p121 = pneg %p74
      %p122 = scmp.lt.s32.totalorder %s14, 1
      %s123 = scalar_select %p122, %s14, 1
      %s124 = smul.addr %s123, 2
      %s125 = smul.addr %s124, 8
      %s126 = scalar_lea.vmem %s0, %s125
      %p127 = scmp.eq.s32.totalorder %s14, 0
      // Predicated region
      $region25: #{transition_block.2} parent=23 // pred_check
        %p128 = pneg %p127
      $region26: #{transition_block.2} parent=23 // pred_check_branch
        %130 = sbr.rel (%p128) target = $region28
      $region27: #{transition_block.2} parent=23 // pred_region
        %vm131 = vcmask 7168
        %132 = vst.msk [vmem:[%s1] sm:$0xff] %vm131, 0.0
        %133 = vst.msk [vmem:[%s2] sm:$0xff] %vm131, 0.0
      $region28: #{transition_block.2} parent=23 // pred_fallthru
        _
      %v134 = vld [vmem:[%s126] sm:$0xff]
      %v135 = vld [vmem:[%s126 + $0x8] sm:$0xff]
      %v136 = vld [vmem:[%s1] sm:$0xff]
      %v137 = vadd.f32 %v134, %v135
      %138 = vadd.xlane.f32.xlu0 %v137
      %v139 = vpop.xlane.xlu0 %138
      %v140 = vadd.f32 %v136, %v139
      %vm141 = vcmask 7168
      %142 = vst.msk [vmem:[%s1] sm:$0xff] %vm141, %v140
      %v143 = vld [vmem:[%s2] sm:$0xff]
      %v144 = vmul.f32 %v134, %v134
      %v145 = vmul.f32 %v135, %v135
      %v146 = vadd.f32 %v144, %v145
      %147 = vadd.xlane.f32.xlu0 %v146
      %v148 = vpop.xlane.xlu0 %147
      %v149 = vadd.f32 %v143, %v148
      %150 = vst.msk [vmem:[%s2] sm:$0xff] %vm141, %v149
      // Predicated region
      $region29: #{transition_block.2} parent=23 // pred_check
        %p151 = pneg %p53
      $region30: #{transition_block.2} parent=23 // pred_check_branch
        %153 = sbr.rel (%p151) target = $region32
      $region31: #{transition_block.2} parent=23 // pred_region
        _
      $region32: #{transition_block.2} parent=23 // pred_fallthru
        _
      // Predicated region
      $region33: #{transition_block.2} parent=23 // pred_check
        %p154 = pneg %p74
      $region34: #{transition_block.2} parent=23 // pred_check_branch
        %156 = sbr.rel (%p154) target = $region36
      $region35: #{transition_block.2} parent=23 // pred_region
        _
      $region36: #{transition_block.2} parent=23 // pred_fallthru
        _
      // Predicated region
      $region37: #{transition_block.2} parent=23 // pred_check
        %p157 = pneg %p53
      $region38: #{transition_block.2} parent=23 // pred_check_branch
        %159 = sbr.rel (%p157) target = $region40
      $region39: #{transition_block.2} parent=23 // pred_region
        _
      $region40: #{transition_block.2} parent=23 // pred_fallthru
        _
      // Predicated region
      $region41: #{transition_block.2} parent=23 // pred_check
        %p160 = pneg %p74
      $region42: #{transition_block.2} parent=23 // pred_check_branch
        %162 = sbr.rel (%p160) target = $region44
      $region43: #{transition_block.2} parent=23 // pred_region
        _
      $region44: #{transition_block.2} parent=23 // pred_fallthru
        _
    $region24: #{transition_block.2} parent=5 // pred_fallthru
      _
    %p163 = scmp.le.s32.totalorder 2, %s9
    // Predicated region
    $region45: #{transition_block.2} parent=5 // pred_check
      %p164 = pneg %p163
    $region46: #{transition_block.2} parent=5 // pred_check_branch
      %166 = sbr.rel (%p164) target = $region48
    $region47: #{transition_block.2} parent=5 // pred_region
      %s167 = ssub.s32 %s9, 2
    $region48: #{transition_block.2} parent=5 // pred_fallthru
      _
  $region6: #{transition_block.2} parent=0 // loop_footer
    %s13 = sadd.s32 1, %s9
  $region7: #{transition_block.2} parent=0 // loop_footer_branch
    %8 = sbr.rel target = $region3
  $region8: #{transition_block.2} parent=0 // loop_exit
    _

// kernel: transition_block.3
$region0: #{transition_block.3}
  #allocation0 [shape = 'u32[]', space=smem, size = 0x4, offset = 0x4, fixed_abs, tag = 'smem constant byte address 0x4 - core index']
  #allocation1 [shape = 'u32[144,128]{1,0:T(1,128)}', space=vmem, size = 0x12000, scoped, tag = 'internal scratch']
  %s0 = inlined_call_operand.vmem [shape: f32[2,8,256], index: 0, kind: input, shape index: {}]
  %s1 = inlined_call_operand.vmem [shape: f32[8,1], index: 1, kind: input, shape index: {}]
  %s2 = inlined_call_operand.vmem [shape: f32[8,1], index: 2, kind: input, shape index: {}]
  %s3 = inlined_call_operand.vmem [shape: f32[4,8], index: 3, kind: input, shape index: {}]
  %s4 = inlined_call_operand.vmem [shape: f32[16,8], index: 4, kind: input, shape index: {}]
  %s5 = inlined_call_operand.vmem [shape: f32[2,4,64], index: 5, kind: output, shape index: {}]
  %s6 = sld [smem:[#allocation0]]
  $region53: #{transition_block.3} parent=0
    _
  %s8 = ssub.s32 1, %s6
  %s9 = scalar_select 0, %s8, %s6
  loop: start=0, step=1, limit=4
  $region2: #{transition_block.3} parent=0 // loop_pre_header
    _
  $region3: #{transition_block.3} parent=0 // loop_header
    %s11 = sphi 0, %s15
    %p12 = scmp.ge.s32.totalorder %s11, 4
    %s18 = sphi 0, %s30
    %s19 = sphi 0, %s26
    %s20 = sphi 0, %s18
    %s21 = sphi 0, %s19
    %s22 = sphi 0, %s20
    %s23 = sphi 0, %s21
    %s35 = sphi 0, %s37
    %s38 = sphi 0, %s35
    %s39 = sphi 0, %s38
    %s55 = sphi 0, %s39
    %s59 = sphi 0, %s59
    %s61 = sphi 0, %s59
    %s62 = sphi 0, %s61
    %s76 = sphi 0, %s62
    %s80 = sphi 0, %s80
    %s82 = sphi 0, %s80
    %s83 = sphi 0, %s82
    %s97 = sphi 0, %s83
    %s101 = sphi 0, %s101
    %s103 = sphi 0, %s101
    %s104 = sphi 0, %s103
    %s118 = sphi 0, %s104
    %s122 = sphi 0, %s122
    %s124 = sphi 0, %s122
    %s125 = sphi 0, %s124
    %s139 = sphi 0, %s125
    %s147 = sphi 0, %s149
    %s150 = sphi 0, %s147
    %s151 = sphi 0, %s150
    %s167 = sphi 0, %s151
  $region4: #{transition_block.3} parent=0 // loop_header_branch
    %14 = sbr.rel (%p12) target = $region8
  $region5: #{transition_block.3} parent=0 // loop_body
    %s16 = ssub.s32 %s11, 1
    %s17 = ssub.s32 %s11, 2
    %s24 = sadd.s32 1, %s19
    %p25 = scmp.ge.s32.totalorder %s24, 1
    %s26 = scalar_select %p25, 0, %s24
    %s27 = sadd.s32 1, %s18
    %s28 = scalar_select %p25, %s27, %s18
    %p29 = scmp.ge.s32.totalorder %s28, 2
    %s30 = scalar_select %p29, 0, %s28
    %s31 = ssub.s32 %s18, %s30
    %s32 = ssub.s32 %s19, %s26
    %s33 = sor.u32 %s31, %s32
    %p34 = scmp.eq.s32.totalorder %s33, 0
    %s36 = sadd.s32 %s35, 1
    %s37 = scalar_select %p34, %s35, %s36
    %p40 = pneg %p34
    %p41 = scmp.eq.s32.totalorder %s11, 1
    %p42 = por %p40, %p41
    %p43 = scmp.ne.s32.totalorder %s35, %s38
    %p44 = scmp.eq.s32.totalorder %s11, 0
    %p45 = por %p43, %p44
    %p46 = scmp.ne.s32.totalorder %s35, %s38
    %p47 = scmp.eq.s32.totalorder %s16, 1
    %p48 = por %p46, %p47
    %p49 = scmp.ne.s32.totalorder %s38, %s39
    %p50 = scmp.eq.s32.totalorder %s16, 0
    %p51 = por %p49, %p50
    %p52 = scmp.ne.s32.totalorder %s38, %s39
    %p53 = scmp.eq.s32.totalorder %s17, 1
    %p54 = por %p52, %p53
    %p56 = scmp.ne.s32.totalorder %s39, %s55
    %p57 = scmp.eq.s32.totalorder %s17, 0
    %p58 = por %p56, %p57
    %s60 = sadd.s32 %s59, 1
    %p63 = scmp.eq.s32.totalorder %s11, 1
    %p64 = scmp.ne.s32.totalorder %s59, %s61
    %p65 = scmp.eq.s32.totalorder %s11, 0
    %p66 = por %p64, %p65
    %p67 = scmp.ne.s32.totalorder %s59, %s61
    %p68 = scmp.eq.s32.totalorder %s16, 1
    %p69 = por %p67, %p68
    %p70 = scmp.ne.s32.totalorder %s61, %s62
    %p71 = scmp.eq.s32.totalorder %s16, 0
    %p72 = por %p70, %p71
    %p73 = scmp.ne.s32.totalorder %s61, %s62
    %p74 = scmp.eq.s32.totalorder %s17, 1
    %p75 = por %p73, %p74
    %p77 = scmp.ne.s32.totalorder %s62, %s76
    %p78 = scmp.eq.s32.totalorder %s17, 0
    %p79 = por %p77, %p78
    %s81 = sadd.s32 %s80, 1
    %p84 = scmp.eq.s32.totalorder %s11, 1
    %p85 = scmp.ne.s32.totalorder %s80, %s82
    %p86 = scmp.eq.s32.totalorder %s11, 0
    %p87 = por %p85, %p86
    %p88 = scmp.ne.s32.totalorder %s80, %s82
    %p89 = scmp.eq.s32.totalorder %s16, 1
    %p90 = por %p88, %p89
    %p91 = scmp.ne.s32.totalorder %s82, %s83
    %p92 = scmp.eq.s32.totalorder %s16, 0
    %p93 = por %p91, %p92
    %p94 = scmp.ne.s32.totalorder %s82, %s83
    %p95 = scmp.eq.s32.totalorder %s17, 1
    %p96 = por %p94, %p95
    %p98 = scmp.ne.s32.totalorder %s83, %s97
    %p99 = scmp.eq.s32.totalorder %s17, 0
    %p100 = por %p98, %p99
    %s102 = sadd.s32 %s101, 1
    %p105 = scmp.eq.s32.totalorder %s11, 1
    %p106 = scmp.ne.s32.totalorder %s101, %s103
    %p107 = scmp.eq.s32.totalorder %s11, 0
    %p108 = por %p106, %p107
    %p109 = scmp.ne.s32.totalorder %s101, %s103
    %p110 = scmp.eq.s32.totalorder %s16, 1
    %p111 = por %p109, %p110
    %p112 = scmp.ne.s32.totalorder %s103, %s104
    %p113 = scmp.eq.s32.totalorder %s16, 0
    %p114 = por %p112, %p113
    %p115 = scmp.ne.s32.totalorder %s103, %s104
    %p116 = scmp.eq.s32.totalorder %s17, 1
    %p117 = por %p115, %p116
    %p119 = scmp.ne.s32.totalorder %s104, %s118
    %p120 = scmp.eq.s32.totalorder %s17, 0
    %p121 = por %p119, %p120
    %s123 = sadd.s32 %s122, 1
    %p126 = scmp.eq.s32.totalorder %s11, 1
    %p127 = scmp.ne.s32.totalorder %s122, %s124
    %p128 = scmp.eq.s32.totalorder %s11, 0
    %p129 = por %p127, %p128
    %p130 = scmp.ne.s32.totalorder %s122, %s124
    %p131 = scmp.eq.s32.totalorder %s16, 1
    %p132 = por %p130, %p131
    %p133 = scmp.ne.s32.totalorder %s124, %s125
    %p134 = scmp.eq.s32.totalorder %s16, 0
    %p135 = por %p133, %p134
    %p136 = scmp.ne.s32.totalorder %s124, %s125
    %p137 = scmp.eq.s32.totalorder %s17, 1
    %p138 = por %p136, %p137
    %p140 = scmp.ne.s32.totalorder %s125, %s139
    %p141 = scmp.eq.s32.totalorder %s17, 0
    %p142 = por %p140, %p141
    %s143 = ssub.s32 %s18, %s30
    %s144 = ssub.s32 %s19, %s26
    %s145 = sor.u32 %s143, %s144
    %p146 = scmp.eq.s32.totalorder %s145, 0
    %s148 = sadd.s32 %s147, 1
    %s149 = scalar_select %p146, %s147, %s148
    %p152 = pneg %p146
    %p153 = scmp.eq.s32.totalorder %s11, 1
    %p154 = por %p152, %p153
    %p155 = scmp.ne.s32.totalorder %s147, %s150
    %p156 = scmp.eq.s32.totalorder %s11, 0
    %p157 = por %p155, %p156
    %p158 = scmp.ne.s32.totalorder %s147, %s150
    %p159 = scmp.eq.s32.totalorder %s16, 1
    %p160 = por %p158, %p159
    %p161 = scmp.ne.s32.totalorder %s150, %s151
    %p162 = scmp.eq.s32.totalorder %s16, 0
    %p163 = por %p161, %p162
    %p164 = scmp.ne.s32.totalorder %s150, %s151
    %p165 = scmp.eq.s32.totalorder %s17, 1
    %p166 = por %p164, %p165
    %p168 = scmp.ne.s32.totalorder %s151, %s167
    %p169 = scmp.eq.s32.totalorder %s17, 0
    %p170 = por %p168, %p169
    %p171 = scmp.le.s32.totalorder 1, %s11
    %p172 = scmp.lt.s32.totalorder %s11, 3
    %p173 = pnand %p171, %p172
    %p174 = pneg %p173
    // Predicated region
    $region9: #{transition_block.3} parent=5 // pred_check
      _
    $region10: #{transition_block.3} parent=5 // pred_check_branch
      %176 = sbr.rel (%p173) target = $region12
    $region11: #{transition_block.3} parent=5 // pred_region
      %s177 = ssub.s32 %s11, 1
      // Predicated region
      $region13: #{transition_block.3} parent=11 // pred_check
        %p178 = pneg %p72
      $region14: #{transition_block.3} parent=11 // pred_check_branch
        %180 = sbr.rel (%p178) target = $region16
      $region15: #{transition_block.3} parent=11 // pred_region
        _
      $region16: #{transition_block.3} parent=11 // pred_fallthru
        _
      // Predicated region
      $region17: #{transition_block.3} parent=11 // pred_check
        %p181 = pneg %p93
      $region18: #{transition_block.3} parent=11 // pred_check_branch
        %183 = sbr.rel (%p181) target = $region20
      $region19: #{transition_block.3} parent=11 // pred_region
        _
      $region20: #{transition_block.3} parent=11 // pred_fallthru
        _
      // Predicated region
      $region21: #{transition_block.3} parent=11 // pred_check
        %p184 = pneg %p114
      $region22: #{transition_block.3} parent=11 // pred_check_branch
        %186 = sbr.rel (%p184) target = $region24
      $region23: #{transition_block.3} parent=11 // pred_region
        _
      $region24: #{transition_block.3} parent=11 // pred_fallthru
        _
      // Predicated region
      $region25: #{transition_block.3} parent=11 // pred_check
        %p187 = pneg %p135
      $region26: #{transition_block.3} parent=11 // pred_check_branch
        %189 = sbr.rel (%p187) target = $region28
      $region27: #{transition_block.3} parent=11 // pred_region
        _
      $region28: #{transition_block.3} parent=11 // pred_fallthru
        _
    $region12: #{transition_block.3} parent=5 // pred_fallthru
      _
    %p190 = scmp.lt.s32.totalorder %s11, 2
    // Predicated region
    $region29: #{transition_block.3} parent=5 // pred_check
      %p191 = pneg %p190
    $region30: #{transition_block.3} parent=5 // pred_check_branch
      %193 = sbr.rel (%p191) target = $region32
    $region31: #{transition_block.3} parent=5 // pred_region
      // Predicated region
      $region33: #{transition_block.3} parent=31 // pred_check
        %p194 = pneg %p45
      $region34: #{transition_block.3} parent=31 // pred_check_branch
        %196 = sbr.rel (%p194) target = $region36
      $region35: #{transition_block.3} parent=31 // pred_region
        %s197 = smul.u32 2, %s19
        %p198 = scmp.lt.s32.totalorder %s18, 1
        %s199 = scalar_select %p198, %s18, 1
        %p200 = scmp.lt.s32.totalorder %s197, 1
        %s201 = scalar_select %p200, %s197, 1
        %s202 = smul.addr %s199, 2
        %s203 = sadd.s32 %s201, %s202
        %s204 = smul.addr %s203, 8
        %s205 = scalar_lea.vmem %s0, %s204
        %s206 = smul.u32 2, %s19
      $region36: #{transition_block.3} parent=31 // pred_fallthru
        _
    $region32: #{transition_block.3} parent=5 // pred_fallthru
      _
    %p207 = scmp.le.s32.totalorder 1, %s11
    %p208 = scmp.lt.s32.totalorder %s11, 3
    %p209 = pnand %p207, %p208
    %p210 = pneg %p209
    // Predicated region
    $region37: #{transition_block.3} parent=5 // pred_check
      _
    $region38: #{transition_block.3} parent=5 // pred_check_branch
      %212 = sbr.rel (%p209) target = $region40
    $region39: #{transition_block.3} parent=5 // pred_region
      %s213 = ssub.s32 %s11, 1
      %s214 = smul.u32 2, %s21
      %p215 = scmp.lt.s32.totalorder %s20, 1
      %s216 = scalar_select %p215, %s20, 1
      %p217 = scmp.lt.s32.totalorder %s214, 1
      %s218 = scalar_select %p217, %s214, 1
      %s219 = smul.addr %s216, 2
      %s220 = sadd.s32 %s218, %s219
      %s221 = smul.addr %s220, 8
      %s222 = scalar_lea.vmem %s0, %s221
      %p223 = pneg %p51
      %p224 = pneg %p48
      %p225 = pneg %p72
      %p226 = pneg %p69
      %p227 = pneg %p93
      %p228 = pneg %p90
      %p229 = pneg %p114
      %p230 = pneg %p111
      %p231 = pneg %p135
      %p232 = pneg %p132
      %p233 = pneg %p163
      %p234 = pneg %p160
      %p235 = scmp.lt.s32.totalorder %s20, 1
      %s236 = scalar_select %p235, %s20, 1
      %p237 = scmp.lt.s32.totalorder %s21, 0
      %s238 = scalar_select %p237, %s21, 0
      %s239 = sadd.s32 %s238, %s236
      %s240 = smul.addr %s239, 4
      %s241 = scalar_lea.vmem %s5, %s240
      %s242 = smul.u32 2, %s21
      %p243 = scmp.lt.s32.totalorder %s20, 1
      %s244 = scalar_select %p243, %s20, 1
      %p245 = scmp.lt.s32.totalorder %s242, 1
      %s246 = scalar_select %p245, %s242, 1
      %s247 = smul.addr %s244, 2
      %s248 = sadd.s32 %s246, %s247
      %s249 = smul.addr %s248, 8
      %s250 = scalar_lea.vmem %s0, %s249
      %s251 = smul.u32 2, %s21
      %p252 = scmp.lt.s32.totalorder %s20, 1
      %s253 = scalar_select %p252, %s20, 1
      %p254 = scmp.lt.s32.totalorder %s21, 0
      %s255 = scalar_select %p254, %s21, 0
      %s256 = sadd.s32 %s255, %s253
      %s257 = smul.addr %s256, 4
      %s258 = scalar_lea.vmem %s5, %s257
      %v259 = vld [vmem:[%s250] sm:$0xff]
      %v260 = vld [vmem:[%s250 + $0x8] sm:$0xff]
      %v261 = vld [vmem:[%s1] sm:$0xff]
      %263 = vset.pattern.permute.xlu0 0
      %264 = vperm.xlu0 %263, %v261
      %v265 = vpop.permute.xlu0 %264
      %v267 = vmul.f32 %v259, %v265
      %v268 = vmul.f32 %v260, %v265
      %v269 = vld [vmem:[%s2] sm:$0xff]
      %271 = vset.pattern.permute.xlu0 0
      %272 = vperm.xlu0 %271, %v269
      %v273 = vpop.permute.xlu0 %272
      %v275 = vadd.f32 %v267, %v273
      %v276 = vadd.f32 %v268, %v273
      %v277 = vmax.f32 %v275, 0.0
      %v278 = vmax.f32 %v276, 0.0
      %v279 = vld [vmem:[%s3] sm:$0xf]
      %vm280 = vcmask 64512
      %v282 = vsel %vm280, %v279, 0
      %284 = vmatprep.subr.mxu0 %v278
      %285 = vmatpush1.msra.mxu0 %v277
      %286 = vmatprep.subr.mxu0 0.0
      %287 = vmatpush1.msra.mxu0 0.0
      %288 = vmatprep.subr.mxu0 0.0
      %289 = vmatpush1.msra.mxu0 0.0
      %290 = vmatprep.subr.mxu0 0.0
      %291 = vmatpush1.msra.mxu0 0.0
      %292 = vmatprep.subr.mxu0 0.0
      %293 = vmatpush1.msra.mxu0 0.0
      %294 = vmatprep.subr.mxu0 0.0
      %295 = vmatpush1.msra.mxu0 0.0
      %296 = vmatprep.subr.mxu0 0.0
      %297 = vmatpush1.msra.mxu0 0.0
      %298 = vmatprep.subr.mxu0 0.0
      %299 = vmatpush1.msra.mxu0 0.0
      %300 = vmatprep.subr.mxu0 0.0
      %301 = vmatpush1.msra.mxu0 0.0
      %302 = vmatprep.subr.mxu0 0.0
      %303 = vmatpush1.msra.mxu0 0.0
      %304 = vmatprep.subr.mxu0 0.0
      %305 = vmatpush1.msra.mxu0 0.0
      %306 = vmatprep.subr.mxu0 0.0
      %307 = vmatpush1.msra.mxu0 0.0
      %308 = vmatprep.subr.mxu0 0.0
      %309 = vmatpush1.msra.mxu0 0.0
      %310 = vmatprep.subr.mxu0 0.0
      %311 = vmatpush1.msra.mxu0 0.0
      %312 = vmatprep.subr.mxu0 0.0
      %313 = vmatpush1.msra.mxu0 0.0
      %314 = vmatprep.subr.mxu0 0.0
      %315 = vmatpush1.msra.mxu0 0.0
      %316 = vmatprep.subr.mxu0 0.0
      %317 = vmatpush1.msra.mxu0 0.0
      %318 = vmatprep.subr.mxu0 0.0
      %319 = vmatpush1.msra.mxu0 0.0
      %320 = vmatprep.subr.mxu0 0.0
      %321 = vmatpush1.msra.mxu0 0.0
      %322 = vmatprep.subr.mxu0 0.0
      %323 = vmatpush1.msra.mxu0 0.0
      %324 = vmatprep.subr.mxu0 0.0
      %325 = vmatpush1.msra.mxu0 0.0
      %326 = vmatprep.subr.mxu0 0.0
      %327 = vmatpush1.msra.mxu0 0.0
      %328 = vmatprep.subr.mxu0 0.0
      %329 = vmatpush1.msra.mxu0 0.0
      %330 = vmatprep.subr.mxu0 0.0
      %331 = vmatpush1.msra.mxu0 0.0
      %332 = vmatprep.subr.mxu0 0.0
      %333 = vmatpush1.msra.mxu0 0.0
      %334 = vmatprep.subr.mxu0 0.0
      %335 = vmatpush1.msra.mxu0 0.0
      %336 = vmatprep.subr.mxu0 0.0
      %337 = vmatpush1.msra.mxu0 0.0
      %338 = vmatprep.subr.mxu0 0.0
      %339 = vmatpush1.msra.mxu0 0.0
      %340 = vmatprep.subr.mxu0 0.0
      %341 = vmatpush1.msra.mxu0 0.0
      %342 = vmatprep.subr.mxu0 0.0
      %343 = vmatpush1.msra.mxu0 0.0
      %344 = vmatprep.subr.mxu0 0.0
      %345 = vmatpush1.msra.mxu0 0.0
      %346 = vmatprep.subr.mxu0 0.0
      %347 = vmatpush1.msra.mxu0 0.0
      %348 = vmatprep.mubr.f32.mxu0 0.0
      %349 = vmatmul.mubr.f32.gmra.mrb[0].mxu0 %v282
      %v350 = vpop.f32.mrb[0].mxu0
      %v351 = vadd.f32 0.0, %v350
      %v352 = vpop.f32.mrb[0].mxu0
      %v353 = vadd.f32 0.0, %v352
      %354 = vdwg.mxu0
      %v355 = vld [vmem:[%s4] sm:$0xff]
      %v356 = vld [vmem:[%s4 + $0x8] sm:$0xff]
      %358 = vrot.lane.b32.xlu0 %v351, 112
      %v359 = vpop.permute.xlu0 %358
      %v361 = vadd.f32 %v351, %v359
      %vm362 = vcmask 130048
      %v364 = vsel %vm362, %v361, 0
      %366 = vmatprep.subr.mxu0 0.0
      %367 = vmatpush1.msra.mxu0 %v355
      %368 = vmatprep.subr.mxu0 0.0
      %369 = vmatpush1.msra.mxu0 %v356
      %370 = vmatprep.subr.mxu0 0.0
      %371 = vmatpush1.msra.mxu0 0.0
      %372 = vmatprep.subr.mxu0 0.0
      %373 = vmatpush1.msra.mxu0 0.0
      %374 = vmatprep.subr.mxu0 0.0
      %375 = vmatpush1.msra.mxu0 0.0
      %376 = vmatprep.subr.mxu0 0.0
      %377 = vmatpush1.msra.mxu0 0.0
      %378 = vmatprep.subr.mxu0 0.0
      %379 = vmatpush1.msra.mxu0 0.0
      %380 = vmatprep.subr.mxu0 0.0
      %381 = vmatpush1.msra.mxu0 0.0
      %382 = vmatprep.subr.mxu0 0.0
      %383 = vmatpush1.msra.mxu0 0.0
      %384 = vmatprep.subr.mxu0 0.0
      %385 = vmatpush1.msra.mxu0 0.0
      %386 = vmatprep.subr.mxu0 0.0
      %387 = vmatpush1.msra.mxu0 0.0
      %388 = vmatprep.subr.mxu0 0.0
      %389 = vmatpush1.msra.mxu0 0.0
      %390 = vmatprep.subr.mxu0 0.0
      %391 = vmatpush1.msra.mxu0 0.0
      %392 = vmatprep.subr.mxu0 0.0
      %393 = vmatpush1.msra.mxu0 0.0
      %394 = vmatprep.subr.mxu0 0.0
      %395 = vmatpush1.msra.mxu0 0.0
      %396 = vmatprep.subr.mxu0 0.0
      %397 = vmatpush1.msra.mxu0 0.0
      %398 = vmatprep.subr.mxu0 0.0
      %399 = vmatpush1.msra.mxu0 0.0
      %400 = vmatprep.subr.mxu0 0.0
      %401 = vmatpush1.msra.mxu0 0.0
      %402 = vmatprep.subr.mxu0 0.0
      %403 = vmatpush1.msra.mxu0 0.0
      %404 = vmatprep.subr.mxu0 0.0
      %405 = vmatpush1.msra.mxu0 0.0
      %406 = vmatprep.subr.mxu0 0.0
      %407 = vmatpush1.msra.mxu0 0.0
      %408 = vmatprep.subr.mxu0 0.0
      %409 = vmatpush1.msra.mxu0 0.0
      %410 = vmatprep.subr.mxu0 0.0
      %411 = vmatpush1.msra.mxu0 0.0
      %412 = vmatprep.subr.mxu0 0.0
      %413 = vmatpush1.msra.mxu0 0.0
      %414 = vmatprep.subr.mxu0 0.0
      %415 = vmatpush1.msra.mxu0 0.0
      %416 = vmatprep.subr.mxu0 0.0
      %417 = vmatpush1.msra.mxu0 0.0
      %418 = vmatprep.subr.mxu0 0.0
      %419 = vmatpush1.msra.mxu0 0.0
      %420 = vmatprep.subr.mxu0 0.0
      %421 = vmatpush1.msra.mxu0 0.0
      %422 = vmatprep.subr.mxu0 0.0
      %423 = vmatpush1.msra.mxu0 0.0
      %424 = vmatprep.subr.mxu0 0.0
      %425 = vmatpush1.msra.mxu0 0.0
      %426 = vmatprep.subr.mxu0 0.0
      %427 = vmatpush1.msra.mxu0 0.0
      %428 = vmatprep.subr.mxu0 0.0
      %429 = vmatpush1.msra.mxu0 0.0
      %430 = vmatprep.mubr.f32.mxu0 0.0
      %431 = vmatmul.mubr.f32.gmra.mrb[0].mxu0 %v364
      %v432 = vpop.f32.mrb[0].mxu0
      %v433 = vadd.f32 0.0, %v432
      %v434 = vpop.f32.mrb[0].mxu0
      %435 = vdwg.mxu0
      %vm436 = vcmask 60416
      %437 = vst.msk [vmem:[%s258] sm:$0xf] %vm436, %v433
      %438 = vrot.lane.b32.xlu0 %v361, 96
      %v439 = vpop.permute.xlu0 %438
      %v440 = vsel %vm362, %v439, 0
      %442 = vmatprep.subr.mxu0 0.0
      %443 = vmatpush1.msra.mxu0 %v355
      %444 = vmatprep.subr.mxu0 0.0
      %445 = vmatpush1.msra.mxu0 %v356
      %446 = vmatprep.subr.mxu0 0.0
      %447 = vmatpush1.msra.mxu0 0.0
      %448 = vmatprep.subr.mxu0 0.0
      %449 = vmatpush1.msra.mxu0 0.0
      %450 = vmatprep.subr.mxu0 0.0
      %451 = vmatpush1.msra.mxu0 0.0
      %452 = vmatprep.subr.mxu0 0.0
      %453 = vmatpush1.msra.mxu0 0.0
      %454 = vmatprep.subr.mxu0 0.0
      %455 = vmatpush1.msra.mxu0 0.0
      %456 = vmatprep.subr.mxu0 0.0
      %457 = vmatpush1.msra.mxu0 0.0
      %458 = vmatprep.subr.mxu0 0.0
      %459 = vmatpush1.msra.mxu0 0.0
      %460 = vmatprep.subr.mxu0 0.0
      %461 = vmatpush1.msra.mxu0 0.0
      %462 = vmatprep.subr.mxu0 0.0
      %463 = vmatpush1.msra.mxu0 0.0
      %464 = vmatprep.subr.mxu0 0.0
      %465 = vmatpush1.msra.mxu0 0.0
      %466 = vmatprep.subr.mxu0 0.0
      %467 = vmatpush1.msra.mxu0 0.0
      %468 = vmatprep.subr.mxu0 0.0
      %469 = vmatpush1.msra.mxu0 0.0
      %470 = vmatprep.subr.mxu0 0.0
      %471 = vmatpush1.msra.mxu0 0.0
      %472 = vmatprep.subr.mxu0 0.0
      %473 = vmatpush1.msra.mxu0 0.0
      %474 = vmatprep.subr.mxu0 0.0
      %475 = vmatpush1.msra.mxu0 0.0
      %476 = vmatprep.subr.mxu0 0.0
      %477 = vmatpush1.msra.mxu0 0.0
      %478 = vmatprep.subr.mxu0 0.0
      %479 = vmatpush1.msra.mxu0 0.0
      %480 = vmatprep.subr.mxu0 0.0
      %481 = vmatpush1.msra.mxu0 0.0
      %482 = vmatprep.subr.mxu0 0.0
      %483 = vmatpush1.msra.mxu0 0.0
      %484 = vmatprep.subr.mxu0 0.0
      %485 = vmatpush1.msra.mxu0 0.0
      %486 = vmatprep.subr.mxu0 0.0
      %487 = vmatpush1.msra.mxu0 0.0
      %488 = vmatprep.subr.mxu0 0.0
      %489 = vmatpush1.msra.mxu0 0.0
      %490 = vmatprep.subr.mxu0 0.0
      %491 = vmatpush1.msra.mxu0 0.0
      %492 = vmatprep.subr.mxu0 0.0
      %493 = vmatpush1.msra.mxu0 0.0
      %494 = vmatprep.subr.mxu0 0.0
      %495 = vmatpush1.msra.mxu0 0.0
      %496 = vmatprep.subr.mxu0 0.0
      %497 = vmatpush1.msra.mxu0 0.0
      %498 = vmatprep.subr.mxu0 0.0
      %499 = vmatpush1.msra.mxu0 0.0
      %500 = vmatprep.subr.mxu0 0.0
      %501 = vmatpush1.msra.mxu0 0.0
      %502 = vmatprep.subr.mxu0 0.0
      %503 = vmatpush1.msra.mxu0 0.0
      %504 = vmatprep.subr.mxu0 0.0
      %505 = vmatpush1.msra.mxu0 0.0
      %506 = vmatprep.mubr.f32.mxu0 0.0
      %507 = vmatmul.mubr.f32.gmra.mrb[0].mxu0 %v440
      %v508 = vpop.f32.mrb[0].mxu0
      %v509 = vadd.f32 0.0, %v508
      %v510 = vpop.f32.mrb[0].mxu0
      %511 = vdwg.mxu0
      %513 = vrot.lane.b32.xlu0 %v509, 8
      %v514 = vpop.permute.xlu0 %513
      %vm516 = vcmask 126016
      %517 = vst.msk [vmem:[%s258] sm:$0xf] %vm516, %v514
      %518 = vrot.lane.b32.xlu0 %v361, 64
      %v519 = vpop.permute.xlu0 %518
      %v520 = vsel %vm362, %v519, 0
      %522 = vmatprep.subr.mxu0 0.0
      %523 = vmatpush1.msra.mxu0 %v355
      %524 = vmatprep.subr.mxu0 0.0
      %525 = vmatpush1.msra.mxu0 %v356
      %526 = vmatprep.subr.mxu0 0.0
      %527 = vmatpush1.msra.mxu0 0.0
      %528 = vmatprep.subr.mxu0 0.0
      %529 = vmatpush1.msra.mxu0 0.0
      %530 = vmatprep.subr.mxu0 0.0
      %531 = vmatpush1.msra.mxu0 0.0
      %532 = vmatprep.subr.mxu0 0.0
      %533 = vmatpush1.msra.mxu0 0.0
      %534 = vmatprep.subr.mxu0 0.0
      %535 = vmatpush1.msra.mxu0 0.0
      %536 = vmatprep.subr.mxu0 0.0
      %537 = vmatpush1.msra.mxu0 0.0
      %538 = vmatprep.subr.mxu0 0.0
      %539 = vmatpush1.msra.mxu0 0.0
      %540 = vmatprep.subr.mxu0 0.0
      %541 = vmatpush1.msra.mxu0 0.0
      %542 = vmatprep.subr.mxu0 0.0
      %543 = vmatpush1.msra.mxu0 0.0
      %544 = vmatprep.subr.mxu0 0.0
      %545 = vmatpush1.msra.mxu0 0.0
      %546 = vmatprep.subr.mxu0 0.0
      %547 = vmatpush1.msra.mxu0 0.0
      %548 = vmatprep.subr.mxu0 0.0
      %549 = vmatpush1.msra.mxu0 0.0
      %550 = vmatprep.subr.mxu0 0.0
      %551 = vmatpush1.msra.mxu0 0.0
      %552 = vmatprep.subr.mxu0 0.0
      %553 = vmatpush1.msra.mxu0 0.0
      %554 = vmatprep.subr.mxu0 0.0
      %555 = vmatpush1.msra.mxu0 0.0
      %556 = vmatprep.subr.mxu0 0.0
      %557 = vmatpush1.msra.mxu0 0.0
      %558 = vmatprep.subr.mxu0 0.0
      %559 = vmatpush1.msra.mxu0 0.0
      %560 = vmatprep.subr.mxu0 0.0
      %561 = vmatpush1.msra.mxu0 0.0
      %562 = vmatprep.subr.mxu0 0.0
      %563 = vmatpush1.msra.mxu0 0.0
      %564 = vmatprep.subr.mxu0 0.0
      %565 = vmatpush1.msra.mxu0 0.0
      %566 = vmatprep.subr.mxu0 0.0
      %567 = vmatpush1.msra.mxu0 0.0
      %568 = vmatprep.subr.mxu0 0.0
      %569 = vmatpush1.msra.mxu0 0.0
      %570 = vmatprep.subr.mxu0 0.0
      %571 = vmatpush1.msra.mxu0 0.0
      %572 = vmatprep.subr.mxu0 0.0
      %573 = vmatpush1.msra.mxu0 0.0
      %574 = vmatprep.subr.mxu0 0.0
      %575 = vmatpush1.msra.mxu0 0.0
      %576 = vmatprep.subr.mxu0 0.0
      %577 = vmatpush1.msra.mxu0 0.0
      %578 = vmatprep.subr.mxu0 0.0
      %579 = vmatpush1.msra.mxu0 0.0
      %580 = vmatprep.subr.mxu0 0.0
      %581 = vmatpush1.msra.mxu0 0.0
      %582 = vmatprep.subr.mxu0 0.0
      %583 = vmatpush1.msra.mxu0 0.0
      %584 = vmatprep.subr.mxu0 0.0
      %585 = vmatpush1.msra.mxu0 0.0
      %586 = vmatprep.mubr.f32.mxu0 0.0
      %587 = vmatmul.mubr.f32.gmra.mrb[0].mxu0 %v520
      %v588 = vpop.f32.mrb[0].mxu0
      %v589 = vadd.f32 0.0, %v588
      %v590 = vpop.f32.mrb[0].mxu0
      %591 = vdwg.mxu0
      %593 = vrot.lane.b32.xlu0 %v589, 16
      %v594 = vpop.permute.xlu0 %593
      %vm596 = vcmask 191616
      %597 = vst.msk [vmem:[%s258] sm:$0xf] %vm596, %v594
      %598 = vrot.lane.b32.xlu0 %v361, 32
      %v599 = vpop.permute.xlu0 %598
      %v600 = vsel %vm362, %v599, 0
      %602 = vmatprep.subr.mxu0 0.0
      %603 = vmatpush1.msra.mxu0 %v355
      %604 = vmatprep.subr.mxu0 0.0
      %605 = vmatpush1.msra.mxu0 %v356
      %606 = vmatprep.subr.mxu0 0.0
      %607 = vmatpush1.msra.mxu0 0.0
      %608 = vmatprep.subr.mxu0 0.0
      %609 = vmatpush1.msra.mxu0 0.0
      %610 = vmatprep.subr.mxu0 0.0
      %611 = vmatpush1.msra.mxu0 0.0
      %612 = vmatprep.subr.mxu0 0.0
      %613 = vmatpush1.msra.mxu0 0.0
      %614 = vmatprep.subr.mxu0 0.0
      %615 = vmatpush1.msra.mxu0 0.0
      %616 = vmatprep.subr.mxu0 0.0
      %617 = vmatpush1.msra.mxu0 0.0
      %618 = vmatprep.subr.mxu0 0.0
      %619 = vmatpush1.msra.mxu0 0.0
      %620 = vmatprep.subr.mxu0 0.0
      %621 = vmatpush1.msra.mxu0 0.0
      %622 = vmatprep.subr.mxu0 0.0
      %623 = vmatpush1.msra.mxu0 0.0
      %624 = vmatprep.subr.mxu0 0.0
      %625 = vmatpush1.msra.mxu0 0.0
      %626 = vmatprep.subr.mxu0 0.0
      %627 = vmatpush1.msra.mxu0 0.0
      %628 = vmatprep.subr.mxu0 0.0
      %629 = vmatpush1.msra.mxu0 0.0
      %630 = vmatprep.subr.mxu0 0.0
      %631 = vmatpush1.msra.mxu0 0.0
      %632 = vmatprep.subr.mxu0 0.0
      %633 = vmatpush1.msra.mxu0 0.0
      %634 = vmatprep.subr.mxu0 0.0
      %635 = vmatpush1.msra.mxu0 0.0
      %636 = vmatprep.subr.mxu0 0.0
      %637 = vmatpush1.msra.mxu0 0.0
      %638 = vmatprep.subr.mxu0 0.0
      %639 = vmatpush1.msra.mxu0 0.0
      %640 = vmatprep.subr.mxu0 0.0
      %641 = vmatpush1.msra.mxu0 0.0
      %642 = vmatprep.subr.mxu0 0.0
      %643 = vmatpush1.msra.mxu0 0.0
      %644 = vmatprep.subr.mxu0 0.0
      %645 = vmatpush1.msra.mxu0 0.0
      %646 = vmatprep.subr.mxu0 0.0
      %647 = vmatpush1.msra.mxu0 0.0
      %648 = vmatprep.subr.mxu0 0.0
      %649 = vmatpush1.msra.mxu0 0.0
      %650 = vmatprep.subr.mxu0 0.0
      %651 = vmatpush1.msra.mxu0 0.0
      %652 = vmatprep.subr.mxu0 0.0
      %653 = vmatpush1.msra.mxu0 0.0
      %654 = vmatprep.subr.mxu0 0.0
      %655 = vmatpush1.msra.mxu0 0.0
      %656 = vmatprep.subr.mxu0 0.0
      %657 = vmatpush1.msra.mxu0 0.0
      %658 = vmatprep.subr.mxu0 0.0
      %659 = vmatpush1.msra.mxu0 0.0
      %660 = vmatprep.subr.mxu0 0.0
      %661 = vmatpush1.msra.mxu0 0.0
      %662 = vmatprep.subr.mxu0 0.0
      %663 = vmatpush1.msra.mxu0 0.0
      %664 = vmatprep.subr.mxu0 0.0
      %665 = vmatpush1.msra.mxu0 0.0
      %666 = vmatprep.mubr.f32.mxu0 0.0
      %667 = vmatmul.mubr.f32.gmra.mrb[0].mxu0 %v600
      %v668 = vpop.f32.mrb[0].mxu0
      %v669 = vadd.f32 0.0, %v668
      %v670 = vpop.f32.mrb[0].mxu0
      %671 = vdwg.mxu0
      %673 = vrot.lane.b32.xlu0 %v669, 24
      %v674 = vpop.permute.xlu0 %673
      %vm676 = vcmask 257216
      %677 = vst.msk [vmem:[%s258] sm:$0xf] %vm676, %v674
      %679 = vrot.lane.b32.xlu0 %v353, 112
      %v680 = vpop.permute.xlu0 %679
      %v682 = vadd.f32 %v353, %v680
      %v684 = vsel %vm362, %v682, 0
      %686 = vmatprep.subr.mxu0 0.0
      %687 = vmatpush1.msra.mxu0 %v355
      %688 = vmatprep.subr.mxu0 0.0
      %689 = vmatpush1.msra.mxu0 %v356
      %690 = vmatprep.subr.mxu0 0.0
      %691 = vmatpush1.msra.mxu0 0.0
      %692 = vmatprep.subr.mxu0 0.0
      %693 = vmatpush1.msra.mxu0 0.0
      %694 = vmatprep.subr.mxu0 0.0
      %695 = vmatpush1.msra.mxu0 0.0
      %696 = vmatprep.subr.mxu0 0.0
      %697 = vmatpush1.msra.mxu0 0.0
      %698 = vmatprep.subr.mxu0 0.0
      %699 = vmatpush1.msra.mxu0 0.0
      %700 = vmatprep.subr.mxu0 0.0
      %701 = vmatpush1.msra.mxu0 0.0
      %702 = vmatprep.subr.mxu0 0.0
      %703 = vmatpush1.msra.mxu0 0.0
      %704 = vmatprep.subr.mxu0 0.0
      %705 = vmatpush1.msra.mxu0 0.0
      %706 = vmatprep.subr.mxu0 0.0
      %707 = vmatpush1.msra.mxu0 0.0
      %708 = vmatprep.subr.mxu0 0.0
      %709 = vmatpush1.msra.mxu0 0.0
      %710 = vmatprep.subr.mxu0 0.0
      %711 = vmatpush1.msra.mxu0 0.0
      %712 = vmatprep.subr.mxu0 0.0
      %713 = vmatpush1.msra.mxu0 0.0
      %714 = vmatprep.subr.mxu0 0.0
      %715 = vmatpush1.msra.mxu0 0.0
      %716 = vmatprep.subr.mxu0 0.0
      %717 = vmatpush1.msra.mxu0 0.0
      %718 = vmatprep.subr.mxu0 0.0
      %719 = vmatpush1.msra.mxu0 0.0
      %720 = vmatprep.subr.mxu0 0.0
      %721 = vmatpush1.msra.mxu0 0.0
      %722 = vmatprep.subr.mxu0 0.0
      %723 = vmatpush1.msra.mxu0 0.0
      %724 = vmatprep.subr.mxu0 0.0
      %725 = vmatpush1.msra.mxu0 0.0
      %726 = vmatprep.subr.mxu0 0.0
      %727 = vmatpush1.msra.mxu0 0.0
      %728 = vmatprep.subr.mxu0 0.0
      %729 = vmatpush1.msra.mxu0 0.0
      %730 = vmatprep.subr.mxu0 0.0
      %731 = vmatpush1.msra.mxu0 0.0
      %732 = vmatprep.subr.mxu0 0.0
      %733 = vmatpush1.msra.mxu0 0.0
      %734 = vmatprep.subr.mxu0 0.0
      %735 = vmatpush1.msra.mxu0 0.0
      %736 = vmatprep.subr.mxu0 0.0
      %737 = vmatpush1.msra.mxu0 0.0
      %738 = vmatprep.subr.mxu0 0.0
      %739 = vmatpush1.msra.mxu0 0.0
      %740 = vmatprep.subr.mxu0 0.0
      %741 = vmatpush1.msra.mxu0 0.0
      %742 = vmatprep.subr.mxu0 0.0
      %743 = vmatpush1.msra.mxu0 0.0
      %744 = vmatprep.subr.mxu0 0.0
      %745 = vmatpush1.msra.mxu0 0.0
      %746 = vmatprep.subr.mxu0 0.0
      %747 = vmatpush1.msra.mxu0 0.0
      %748 = vmatprep.subr.mxu0 0.0
      %749 = vmatpush1.msra.mxu0 0.0
      %750 = vmatprep.mubr.f32.mxu0 0.0
      %751 = vmatmul.mubr.f32.gmra.mrb[0].mxu0 %v684
      %v752 = vpop.f32.mrb[0].mxu0
      %v753 = vadd.f32 0.0, %v752
      %v754 = vpop.f32.mrb[0].mxu0
      %755 = vdwg.mxu0
      %757 = vrot.lane.b32.xlu0 %v753, 32
      %v758 = vpop.permute.xlu0 %757
      %vm760 = vcmask 322816
      %761 = vst.msk [vmem:[%s258] sm:$0xf] %vm760, %v758
      %762 = vrot.lane.b32.xlu0 %v682, 96
      %v763 = vpop.permute.xlu0 %762
      %v764 = vsel %vm362, %v763, 0
      %766 = vmatprep.subr.mxu0 0.0
      %767 = vmatpush1.msra.mxu0 %v355
      %768 = vmatprep.subr.mxu0 0.0
      %769 = vmatpush1.msra.mxu0 %v356
      %770 = vmatprep.subr.mxu0 0.0
      %771 = vmatpush1.msra.mxu0 0.0
      %772 = vmatprep.subr.mxu0 0.0
      %773 = vmatpush1.msra.mxu0 0.0
      %774 = vmatprep.subr.mxu0 0.0
      %775 = vmatpush1.msra.mxu0 0.0
      %776 = vmatprep.subr.mxu0 0.0
      %777 = vmatpush1.msra.mxu0 0.0
      %778 = vmatprep.subr.mxu0 0.0
      %779 = vmatpush1.msra.mxu0 0.0
      %780 = vmatprep.subr.mxu0 0.0
      %781 = vmatpush1.msra.mxu0 0.0
      %782 = vmatprep.subr.mxu0 0.0
      %783 = vmatpush1.msra.mxu0 0.0
      %784 = vmatprep.subr.mxu0 0.0
      %785 = vmatpush1.msra.mxu0 0.0
      %786 = vmatprep.subr.mxu0 0.0
      %787 = vmatpush1.msra.mxu0 0.0
      %788 = vmatprep.subr.mxu0 0.0
      %789 = vmatpush1.msra.mxu0 0.0
      %790 = vmatprep.subr.mxu0 0.0
      %791 = vmatpush1.msra.mxu0 0.0
      %792 = vmatprep.subr.mxu0 0.0
      %793 = vmatpush1.msra.mxu0 0.0
      %794 = vmatprep.subr.mxu0 0.0
      %795 = vmatpush1.msra.mxu0 0.0
      %796 = vmatprep.subr.mxu0 0.0
      %797 = vmatpush1.msra.mxu0 0.0
      %798 = vmatprep.subr.mxu0 0.0
      %799 = vmatpush1.msra.mxu0 0.0
      %800 = vmatprep.subr.mxu0 0.0
      %801 = vmatpush1.msra.mxu0 0.0
      %802 = vmatprep.subr.mxu0 0.0
      %803 = vmatpush1.msra.mxu0 0.0
      %804 = vmatprep.subr.mxu0 0.0
      %805 = vmatpush1.msra.mxu0 0.0
      %806 = vmatprep.subr.mxu0 0.0
      %807 = vmatpush1.msra.mxu0 0.0
      %808 = vmatprep.subr.mxu0 0.0
      %809 = vmatpush1.msra.mxu0 0.0
      %810 = vmatprep.subr.mxu0 0.0
      %811 = vmatpush1.msra.mxu0 0.0
      %812 = vmatprep.subr.mxu0 0.0
      %813 = vmatpush1.msra.mxu0 0.0
      %814 = vmatprep.subr.mxu0 0.0
      %815 = vmatpush1.msra.mxu0 0.0
      %816 = vmatprep.subr.mxu0 0.0
      %817 = vmatpush1.msra.mxu0 0.0
      %818 = vmatprep.subr.mxu0 0.0
      %819 = vmatpush1.msra.mxu0 0.0
      %820 = vmatprep.subr.mxu0 0.0
      %821 = vmatpush1.msra.mxu0 0.0
      %822 = vmatprep.subr.mxu0 0.0
      %823 = vmatpush1.msra.mxu0 0.0
      %824 = vmatprep.subr.mxu0 0.0
      %825 = vmatpush1.msra.mxu0 0.0
      %826 = vmatprep.subr.mxu0 0.0
      %827 = vmatpush1.msra.mxu0 0.0
      %828 = vmatprep.subr.mxu0 0.0
      %829 = vmatpush1.msra.mxu0 0.0
      %830 = vmatprep.mubr.f32.mxu0 0.0
      %831 = vmatmul.mubr.f32.gmra.mrb[0].mxu0 %v764
      %v832 = vpop.f32.mrb[0].mxu0
      %v833 = vadd.f32 0.0, %v832
      %v834 = vpop.f32.mrb[0].mxu0
      %835 = vdwg.mxu0
      %837 = vrot.lane.b32.xlu0 %v833, 40
      %v838 = vpop.permute.xlu0 %837
      %vm840 = vcmask 388416
      %841 = vst.msk [vmem:[%s258] sm:$0xf] %vm840, %v838
      %842 = vrot.lane.b32.xlu0 %v682, 64
      %v843 = vpop.permute.xlu0 %842
      %v844 = vsel %vm362, %v843, 0
      %846 = vmatprep.subr.mxu0 0.0
      %847 = vmatpush1.msra.mxu0 %v355
      %848 = vmatprep.subr.mxu0 0.0
      %849 = vmatpush1.msra.mxu0 %v356
      %850 = vmatprep.subr.mxu0 0.0
      %851 = vmatpush1.msra.mxu0 0.0
      %852 = vmatprep.subr.mxu0 0.0
      %853 = vmatpush1.msra.mxu0 0.0
      %854 = vmatprep.subr.mxu0 0.0
      %855 = vmatpush1.msra.mxu0 0.0
      %856 = vmatprep.subr.mxu0 0.0
      %857 = vmatpush1.msra.mxu0 0.0
      %858 = vmatprep.subr.mxu0 0.0
      %859 = vmatpush1.msra.mxu0 0.0
      %860 = vmatprep.subr.mxu0 0.0
      %861 = vmatpush1.msra.mxu0 0.0
      %862 = vmatprep.subr.mxu0 0.0
      %863 = vmatpush1.msra.mxu0 0.0
      %864 = vmatprep.subr.mxu0 0.0
      %865 = vmatpush1.msra.mxu0 0.0
      %866 = vmatprep.subr.mxu0 0.0
      %867 = vmatpush1.msra.mxu0 0.0
      %868 = vmatprep.subr.mxu0 0.0
      %869 = vmatpush1.msra.mxu0 0.0
      %870 = vmatprep.subr.mxu0 0.0
      %871 = vmatpush1.msra.mxu0 0.0
      %872 = vmatprep.subr.mxu0 0.0
      %873 = vmatpush1.msra.mxu0 0.0
      %874 = vmatprep.subr.mxu0 0.0
      %875 = vmatpush1.msra.mxu0 0.0
      %876 = vmatprep.subr.mxu0 0.0
      %877 = vmatpush1.msra.mxu0 0.0
      %878 = vmatprep.subr.mxu0 0.0
      %879 = vmatpush1.msra.mxu0 0.0
      %880 = vmatprep.subr.mxu0 0.0
      %881 = vmatpush1.msra.mxu0 0.0
      %882 = vmatprep.subr.mxu0 0.0
      %883 = vmatpush1.msra.mxu0 0.0
      %884 = vmatprep.subr.mxu0 0.0
      %885 = vmatpush1.msra.mxu0 0.0
      %886 = vmatprep.subr.mxu0 0.0
      %887 = vmatpush1.msra.mxu0 0.0
      %888 = vmatprep.subr.mxu0 0.0
      %889 = vmatpush1.msra.mxu0 0.0
      %890 = vmatprep.subr.mxu0 0.0
      %891 = vmatpush1.msra.mxu0 0.0
      %892 = vmatprep.subr.mxu0 0.0
      %893 = vmatpush1.msra.mxu0 0.0
      %894 = vmatprep.subr.mxu0 0.0
      %895 = vmatpush1.msra.mxu0 0.0
      %896 = vmatprep.subr.mxu0 0.0
      %897 = vmatpush1.msra.mxu0 0.0
      %898 = vmatprep.subr.mxu0 0.0
      %899 = vmatpush1.msra.mxu0 0.0
      %900 = vmatprep.subr.mxu0 0.0
      %901 = vmatpush1.msra.mxu0 0.0
      %902 = vmatprep.subr.mxu0 0.0
      %903 = vmatpush1.msra.mxu0 0.0
      %904 = vmatprep.subr.mxu0 0.0
      %905 = vmatpush1.msra.mxu0 0.0
      %906 = vmatprep.subr.mxu0 0.0
      %907 = vmatpush1.msra.mxu0 0.0
      %908 = vmatprep.subr.mxu0 0.0
      %909 = vmatpush1.msra.mxu0 0.0
      %910 = vmatprep.mubr.f32.mxu0 0.0
      %911 = vmatmul.mubr.f32.gmra.mrb[0].mxu0 %v844
      %v912 = vpop.f32.mrb[0].mxu0
      %v913 = vadd.f32 0.0, %v912
      %v914 = vpop.f32.mrb[0].mxu0
      %915 = vdwg.mxu0
      %917 = vrot.lane.b32.xlu0 %v913, 48
      %v918 = vpop.permute.xlu0 %917
      %vm920 = vcmask 454016
      %921 = vst.msk [vmem:[%s258] sm:$0xf] %vm920, %v918
      %922 = vrot.lane.b32.xlu0 %v682, 32
      %v923 = vpop.permute.xlu0 %922
      %v924 = vsel %vm362, %v923, 0
      %926 = vmatprep.subr.mxu0 0.0
      %927 = vmatpush1.msra.mxu0 %v355
      %928 = vmatprep.subr.mxu0 0.0
      %929 = vmatpush1.msra.mxu0 %v356
      %930 = vmatprep.subr.mxu0 0.0
      %931 = vmatpush1.msra.mxu0 0.0
      %932 = vmatprep.subr.mxu0 0.0
      %933 = vmatpush1.msra.mxu0 0.0
      %934 = vmatprep.subr.mxu0 0.0
      %935 = vmatpush1.msra.mxu0 0.0
      %936 = vmatprep.subr.mxu0 0.0
      %937 = vmatpush1.msra.mxu0 0.0
      %938 = vmatprep.subr.mxu0 0.0
      %939 = vmatpush1.msra.mxu0 0.0
      %940 = vmatprep.subr.mxu0 0.0
      %941 = vmatpush1.msra.mxu0 0.0
      %942 = vmatprep.subr.mxu0 0.0
      %943 = vmatpush1.msra.mxu0 0.0
      %944 = vmatprep.subr.mxu0 0.0
      %945 = vmatpush1.msra.mxu0 0.0
      %946 = vmatprep.subr.mxu0 0.0
      %947 = vmatpush1.msra.mxu0 0.0
      %948 = vmatprep.subr.mxu0 0.0
      %949 = vmatpush1.msra.mxu0 0.0
      %950 = vmatprep.subr.mxu0 0.0
      %951 = vmatpush1.msra.mxu0 0.0
      %952 = vmatprep.subr.mxu0 0.0
      %953 = vmatpush1.msra.mxu0 0.0
      %954 = vmatprep.subr.mxu0 0.0
      %955 = vmatpush1.msra.mxu0 0.0
      %956 = vmatprep.subr.mxu0 0.0
      %957 = vmatpush1.msra.mxu0 0.0
      %958 = vmatprep.subr.mxu0 0.0
      %959 = vmatpush1.msra.mxu0 0.0
      %960 = vmatprep.subr.mxu0 0.0
      %961 = vmatpush1.msra.mxu0 0.0
      %962 = vmatprep.subr.mxu0 0.0
      %963 = vmatpush1.msra.mxu0 0.0
      %964 = vmatprep.subr.mxu0 0.0
      %965 = vmatpush1.msra.mxu0 0.0
      %966 = vmatprep.subr.mxu0 0.0
      %967 = vmatpush1.msra.mxu0 0.0
      %968 = vmatprep.subr.mxu0 0.0
      %969 = vmatpush1.msra.mxu0 0.0
      %970 = vmatprep.subr.mxu0 0.0
      %971 = vmatpush1.msra.mxu0 0.0
      %972 = vmatprep.subr.mxu0 0.0
      %973 = vmatpush1.msra.mxu0 0.0
      %974 = vmatprep.subr.mxu0 0.0
      %975 = vmatpush1.msra.mxu0 0.0
      %976 = vmatprep.subr.mxu0 0.0
      %977 = vmatpush1.msra.mxu0 0.0
      %978 = vmatprep.subr.mxu0 0.0
      %979 = vmatpush1.msra.mxu0 0.0
      %980 = vmatprep.subr.mxu0 0.0
      %981 = vmatpush1.msra.mxu0 0.0
      %982 = vmatprep.subr.mxu0 0.0
      %983 = vmatpush1.msra.mxu0 0.0
      %984 = vmatprep.subr.mxu0 0.0
      %985 = vmatpush1.msra.mxu0 0.0
      %986 = vmatprep.subr.mxu0 0.0
      %987 = vmatpush1.msra.mxu0 0.0
      %988 = vmatprep.subr.mxu0 0.0
      %989 = vmatpush1.msra.mxu0 0.0
      %990 = vmatprep.mubr.f32.mxu0 0.0
      %991 = vmatmul.mubr.f32.gmra.mrb[0].mxu0 %v924
      %v992 = vpop.f32.mrb[0].mxu0
      %v993 = vadd.f32 0.0, %v992
      %v994 = vpop.f32.mrb[0].mxu0
      %995 = vdwg.mxu0
      %997 = vrot.lane.b32.xlu0 %v993, 56
      %v998 = vpop.permute.xlu0 %997
      %vm1000 = vcmask 519616
      %1001 = vst.msk [vmem:[%s258] sm:$0xf] %vm1000, %v998
      %p1002 = scmp.lt.s32.totalorder %s20, 1
      %s1003 = scalar_select %p1002, %s20, 1
      %p1004 = scmp.lt.s32.totalorder %s21, 0
      %s1005 = scalar_select %p1004, %s21, 0
      %s1006 = sadd.s32 %s1005, %s1003
      %s1007 = smul.addr %s1006, 4
      %s1008 = scalar_lea.vmem %s5, %s1007
      // Predicated region
      $region41: #{transition_block.3} parent=39 // pred_check
        %p1009 = pneg %p160
      $region42: #{transition_block.3} parent=39 // pred_check_branch
        %1011 = sbr.rel (%p1009) target = $region44
      $region43: #{transition_block.3} parent=39 // pred_region
        _
      $region44: #{transition_block.3} parent=39 // pred_fallthru
        _
    $region40: #{transition_block.3} parent=5 // pred_fallthru
      _
    %p1012 = scmp.le.s32.totalorder 2, %s11
    // Predicated region
    $region45: #{transition_block.3} parent=5 // pred_check
      %p1013 = pneg %p1012
    $region46: #{transition_block.3} parent=5 // pred_check_branch
      %1015 = sbr.rel (%p1013) target = $region48
    $region47: #{transition_block.3} parent=5 // pred_region
      %s1016 = ssub.s32 %s11, 2
      // Predicated region
      $region49: #{transition_block.3} parent=47 // pred_check
        %p1017 = pneg %p166
      $region50: #{transition_block.3} parent=47 // pred_check_branch
        %1019 = sbr.rel (%p1017) target = $region52
      $region51: #{transition_block.3} parent=47 // pred_region
        %p1020 = scmp.lt.s32.totalorder %s22, 1
        %s1021 = scalar_select %p1020, %s22, 1
        %p1022 = scmp.lt.s32.totalorder %s23, 0
        %s1023 = scalar_select %p1022, %s23, 0
        %s1024 = sadd.s32 %s1023, %s1021
        %s1025 = smul.addr %s1024, 4
        %s1026 = scalar_lea.vmem %s5, %s1025
      $region52: #{transition_block.3} parent=47 // pred_fallthru
        _
    $region48: #{transition_block.3} parent=5 // pred_fallthru
      _
  $region6: #{transition_block.3} parent=0 // loop_footer
    %s15 = sadd.s32 1, %s11
  $region7: #{transition_block.3} parent=0 // loop_footer_branch
    %10 = sbr.rel target = $region3
  $region8: #{transition_block.3} parent=0 // loop_exit
    _

</llo_original>
